<compile_context>
chip_gen: v7x
topology: tpu7x:2x2x1
jax: 0.10.0
libtpu: 0.0.40
codegen_flags: <defaults>
</compile_context>

<pallas_src>
import math
import functools

import jax
import jax.numpy as jnp
from jax.experimental import pallas as pl
from jax.experimental.pallas import tpu as pltpu


def attention_kernel(qx_ref, kvx_ref, bias_ref,
                     wq_ref, wk_ref, wv_ref, wg_ref, bg_ref, wo_ref, bo_ref,
                     out_ref, k_scr, v_scr, q_scr, o_scr,
                     *, no_heads, c_hidden):
    H, C = no_heads, c_hidden
    qi = pl.program_id(1)

    # ---- K/V: fused wide projections, computed once per batch row and cached
    #      head-major in VMEM scratch across all Q tiles. ----
    @pl.when(qi == 0)
    def _():
        kvx = kvx_ref[0]                                              # (K, Ck) bf16
        k = jnp.dot(kvx, wk_ref[...],
                    preferred_element_type=jnp.float32)               # (K, HC)
        v = jnp.dot(kvx, wv_ref[...],
                    preferred_element_type=jnp.float32)               # (K, HC)
        k_bf = k.astype(k_scr.dtype)
        v_bf = v.astype(v_scr.dtype)
        for h in range(H):                                            # static head split
            k_scr[h] = k_bf[:, h * C:(h + 1) * C]
            v_scr[h] = v_bf[:, h * C:(h + 1) * C]

    qx = qx_ref[0]                                                    # (tq, Cq) bf16

    # ---- Q / G: fused wide projections, lane-dense (tq, H*C). ----
    # 1/sqrt(c_hidden) is already folded into wq host-side.
    q = jnp.dot(qx, wq_ref[...], preferred_element_type=jnp.float32)  # (tq, HC)
    g = jnp.dot(qx, wg_ref[...], preferred_element_type=jnp.float32)  # (tq, HC)
    g = jax.nn.sigmoid(g + bg_ref[...])                               # (tq, HC) f32

    q_bf = q.astype(q_scr.dtype)
    for h in range(H):                                                # static head split
        q_scr[h] = q_bf[:, h * C:(h + 1) * C]

    # ---- scores + bias + softmax (f32 math), head-batched MXU matmuls ----
    s = jnp.einsum('hqc,hkc->hqk', q_scr[...], k_scr[...],
                   preferred_element_type=jnp.float32)                # (H, tq, K)
    s = s + bias_ref[0]                # (Hb, tq, K) bf16 -> broadcasts over heads
    s = s - jnp.max(s, axis=-1, keepdims=True)
    p = jnp.exp(s)
    denom = jnp.sum(p, axis=-1, keepdims=True)                        # (H, tq, 1)

    o = jnp.einsum('hqk,hkc->hqc', p.astype(jnp.bfloat16), v_scr[...],
                   preferred_element_type=jnp.float32)                # (H, tq, C)
    o = o * pl.reciprocal(denom, approx=True)

    # ---- merge heads back lane-dense, gate, fused output projection ----
    for h in range(H):
        o_scr[:, h * C:(h + 1) * C] = o[h]
    og = o_scr[...] * g                                               # (tq, HC) f32

    out = jnp.dot(og.astype(jnp.bfloat16), wo_ref[...],
                  preferred_element_type=jnp.float32)                 # (tq, Cq)
    out_ref[0] = (out + bo_ref[0]).astype(out_ref.dtype)


def attention_pallas(q_x, kv_x, bias, params, *, no_heads, c_hidden,
                     block_q=128):
    B, Q, Cq = q_x.shape
    _, K, Ck = kv_x.shape
    Bb, Hb, Qb, Kb = bias.shape
    assert Bb == B and Qb == Q and Kb == K and Hb in (1, no_heads)
    HC = no_heads * c_hidden

    wq, wk, wv, wg, bg, wo, bo = params  # weights stored (in, out); biases (1, out)

    f32, bf16 = jnp.float32, jnp.bfloat16
    scale = 1.0 / math.sqrt(c_hidden)

    # Fused (in, H*C) weight layouts (nn.Linear order already has head-major
    # output columns h*C + c); bf16 MXU operands; scale folded into wq.
    wq_f = (wq.astype(f32) * scale).astype(bf16)     # (Cq, HC)
    wk_f = wk.astype(bf16)                           # (Ck, HC)
    wv_f = wv.astype(bf16)                           # (Ck, HC)
    wg_f = wg.astype(bf16)                           # (Cq, HC)
    bg_f = bg.astype(f32)                            # (1, HC)
    wo_f = wo.astype(bf16)                           # (HC, Cq)
    bo_f = bo.astype(f32)                            # (1, Cq)

    qx_bf = q_x.astype(bf16)
    kvx_bf = kv_x.astype(bf16)
    bias_bf = bias.astype(bf16)                      # half the DMA of the biggest stream

    # Q tiling: bounds per-step VMEM (bias/scores) and exposes grid structure.
    tq = Q if Q <= block_q else block_q
    assert Q % tq == 0, "Q must be divisible by the Q tile size"
    n_q = Q // tq

    kernel = functools.partial(attention_kernel,
                               no_heads=no_heads, c_hidden=c_hidden)

    def full(shape):
        return pl.BlockSpec(shape, lambda b, qi, _n=len(shape): (0,) * _n)

    # Advisory roofline for the XLA scheduler.
    flops = 2 * B * (2 * Q * Cq * HC            # q, g projections
                     + 2 * K * Ck * HC          # k, v projections (once per b)
                     + 2 * no_heads * Q * K * c_hidden  # scores + PV
                     + Q * HC * Cq)             # output projection
    transcendentals = B * (no_heads * Q * K + Q * HC)   # exp + sigmoid
    bytes_accessed = (B * Q * Cq * 2 + B * K * Ck * 2 + B * Hb * Q * K * 2
                      + B * Q * Cq * 4
                      + 2 * (3 * Cq * HC + 2 * Ck * HC + HC * Cq)
                      + 4 * (HC + Cq))
    cost = pl.CostEstimate(flops=flops, transcendentals=transcendentals,
                           bytes_accessed=bytes_accessed)

    return pl.pallas_call(
        kernel,
        out_shape=jax.ShapeDtypeStruct((B, Q, Cq), jnp.float32),
        grid=(B, n_q),
        in_specs=[
            pl.BlockSpec((1, tq, Cq), lambda b, qi: (b, qi, 0)),        # q_x
            pl.BlockSpec((1, K, Ck), lambda b, qi: (b, 0, 0)),          # kv_x
            pl.BlockSpec((1, Hb, tq, K), lambda b, qi: (b, 0, qi, 0)),  # bias
            full((Cq, HC)),    # wq (scaled, fused)
            full((Ck, HC)),    # wk (fused)
            full((Ck, HC)),    # wv (fused)
            full((Cq, HC)),    # wg (fused)
            full((1, HC)),     # bg
            full((HC, Cq)),    # wo (fused)
            full((1, Cq)),     # bo
        ],
        out_specs=pl.BlockSpec((1, tq, Cq), lambda b, qi: (b, qi, 0)),
        scratch_shapes=[
            pltpu.VMEM((no_heads, K, c_hidden), bf16),    # cached projected K
            pltpu.VMEM((no_heads, K, c_hidden), bf16),    # cached projected V
            pltpu.VMEM((no_heads, tq, c_hidden), bf16),   # head-split Q
            pltpu.VMEM((tq, HC), f32),                    # merged attention output
        ],
        compiler_params=pltpu.CompilerParams(
            # b parallel (megacore-shardable); qi arbitrary so the K/V scratch
            # carries across Q tiles of the same batch row.
            dimension_semantics=("parallel", "arbitrary"),
            vmem_limit_bytes=48 * 1024 * 1024),
        cost_estimate=cost,
    )(qx_bf, kvx_bf, bias_bf, wq_f, wk_f, wv_f, wg_f, bg_f, wo_f, bo_f)


def attention_reference(q_x, kv_x, bias, params, *, no_heads, c_hidden):
    """Plain-JAX f32 replica of the PyTorch forward pass (for validation)."""
    wq, wk, wv, wg, bg, wo, bo = params
    B, Q, Cq = q_x.shape
    _, K, _ = kv_x.shape
    q = (q_x @ wq).reshape(B, Q, no_heads, c_hidden).transpose(0, 2, 1, 3)
    k = (kv_x @ wk).reshape(B, K, no_heads, c_hidden).transpose(0, 2, 1, 3)
    v = (kv_x @ wv).reshape(B, K, no_heads, c_hidden).transpose(0, 2, 1, 3)
    q = q / math.sqrt(c_hidden)
    a = jnp.einsum("bhqc,bhkc->bhqk", q, k) + bias   # bias broadcasts over H
    a = jax.nn.softmax(a, axis=-1)
    o = jnp.einsum("bhqk,bhkc->bhqc", a, v)          # [B, H, Q, C]
    o = o.transpose(0, 2, 1, 3)                      # [B, Q, H, C]
    g = jax.nn.sigmoid(q_x @ wg + bg[0]).reshape(B, Q, no_heads, c_hidden)
    o = (o * g).reshape(B, Q, no_heads * c_hidden)
    return o @ wo + bo[0]


if __name__ == "__main__":
    # Small, deterministic problem
    B, Q, K = 2, 8, 8
    c_q = c_k = c_v = 16
    c_hidden, no_heads = 8, 4
    HC = c_hidden * no_heads

    key = jax.random.PRNGKey(0)
    ks = jax.random.split(key, 10)

    q_x = jax.random.normal(ks[0], (B, Q, c_q), jnp.float32)
    kv_x = jax.random.normal(ks[1], (B, K, c_k), jnp.float32)
    # Single bias that broadcasts to [B, H, Q, K]; kept un-broadcast (Hb=1).
    bias = jax.random.normal(ks[2], (B, 1, Q, K), jnp.float32) * 0.5

    # Deterministic synthetic parameters (nn.Linear weights, stored as (in, out))
    wq = jax.random.normal(ks[3], (c_q, HC), jnp.float32) * 0.1
    wk = jax.random.normal(ks[4], (c_k, HC), jnp.float32) * 0.1
    wv = jax.random.normal(ks[5], (c_v, HC), jnp.float32) * 0.1
    wg = jax.random.normal(ks[6], (c_q, HC), jnp.float32) * 0.1
    bg = jax.random.normal(ks[7], (1, HC), jnp.float32) * 0.1
    wo = jax.random.normal(ks[8], (HC, c_q), jnp.float32) * 0.1
    bo = jax.random.normal(ks[9], (1, c_q), jnp.float32) * 0.1
    params = (wq, wk, wv, wg, bg, wo, bo)

    out = attention_pallas(q_x, kv_x, bias, params,
                           no_heads=no_heads, c_hidden=c_hidden)
    out = jax.block_until_ready(out)

    ref = attention_reference(q_x, kv_x, bias, params,
                              no_heads=no_heads, c_hidden=c_hidden)
    assert out.shape == (B, Q, c_q)
    # bf16 MXU operands / bf16 bias -> compare vs the f32 reference at bf16 tol.
    assert jnp.allclose(out, ref, atol=2e-2, rtol=2e-2), "mismatch vs reference"

    print("KERNEL_OK")
</pallas_src>

<mosaic_0001>
module attributes {stable_mosaic.version = 11 : i64} {
  func.func @attention_kernel(%arg0: i32, %arg1: i32, %arg2: memref<1x8x16xbf16, #tpu.memory_space<vmem>>, %arg3: memref<1x8x16xbf16, #tpu.memory_space<vmem>>, %arg4: memref<1x1x8x8xbf16, #tpu.memory_space<vmem>>, %arg5: memref<16x32xbf16, #tpu.memory_space<vmem>>, %arg6: memref<16x32xbf16, #tpu.memory_space<vmem>>, %arg7: memref<16x32xbf16, #tpu.memory_space<vmem>>, %arg8: memref<16x32xbf16, #tpu.memory_space<vmem>>, %arg9: memref<1x32xf32, #tpu.memory_space<vmem>>, %arg10: memref<32x16xbf16, #tpu.memory_space<vmem>>, %arg11: memref<1x16xf32, #tpu.memory_space<vmem>>, %arg12: memref<1x8x16xf32, #tpu.memory_space<vmem>>, %arg13: memref<4x8x8xbf16, #tpu.memory_space<vmem>>, %arg14: memref<4x8x8xbf16, #tpu.memory_space<vmem>>, %arg15: memref<4x8x8xbf16, #tpu.memory_space<vmem>>, %arg16: memref<8x32xf32, #tpu.memory_space<vmem>>) attributes {dimension_semantics = [#tpu.dimension_semantics<parallel>, #tpu.dimension_semantics<arbitrary>], iteration_bounds = array<i64: 2, 1>, scalar_prefetch = 0 : i64, scratch_operands = 4 : i64, tpu.core_type = #tpu.core_type<tc>, window_params = [{transform_indices = @transform_0, window_bounds = array<i64: 1, 8, 16>}, {transform_indices = @transform_1, window_bounds = array<i64: 1, 8, 16>}, {transform_indices = @transform_2, window_bounds = array<i64: 1, 1, 8, 8>}, {pipeline_mode = #tpu.pipeline_mode<synchronous>, transform_indices = @transform_3, window_bounds = array<i64: 16, 32>}, {pipeline_mode = #tpu.pipeline_mode<synchronous>, transform_indices = @transform_4, window_bounds = array<i64: 16, 32>}, {pipeline_mode = #tpu.pipeline_mode<synchronous>, transform_indices = @transform_5, window_bounds = array<i64: 16, 32>}, {pipeline_mode = #tpu.pipeline_mode<synchronous>, transform_indices = @transform_6, window_bounds = array<i64: 16, 32>}, {pipeline_mode = #tpu.pipeline_mode<synchronous>, transform_indices = @transform_7, window_bounds = array<i64: 1, 32>}, {pipeline_mode = #tpu.pipeline_mode<synchronous>, transform_indices = @transform_8, window_bounds = array<i64: 32, 16>}, {pipeline_mode = #tpu.pipeline_mode<synchronous>, transform_indices = @transform_9, window_bounds = array<i64: 1, 16>}, {transform_indices = @transform_10, window_bounds = array<i64: 1, 8, 16>}]} {
    %c0_i32 = arith.constant 0 : i32
    %0 = arith.cmpi eq, %arg1, %c0_i32 : i32
    %1 = arith.extui %0 : i1 to i32
    %c0_i32_0 = arith.constant 0 : i32
    %2 = arith.cmpi ne, %1, %c0_i32_0 : i32
    scf.if %2 {
      %c0_52 = arith.constant 0 : index
      %c0_53 = arith.constant 0 : index
      %c0_54 = arith.constant 0 : index
      %80 = vector.load %arg3[%c0_52, %c0_53, %c0_54] : memref<1x8x16xbf16, #tpu.memory_space<vmem>>, vector<1x8x16xbf16>
      %81 = vector.shape_cast %80 : vector<1x8x16xbf16> to vector<8x16xbf16>
      %c0_55 = arith.constant 0 : index
      %c0_56 = arith.constant 0 : index
      %82 = vector.load %arg6[%c0_55, %c0_56] : memref<16x32xbf16, #tpu.memory_space<vmem>>, vector<16x32xbf16>
      %cst_57 = arith.constant dense<0.000000e+00> : vector<8x32xf32>
      %83 = tpu.matmul %81, %82, %cst_57 {dimension_numbers = #tpu.dot_dimension_numbers<[1], [0], [0], [1], [0, 0, 1, 1], [], []>} : vector<8x16xbf16>, vector<16x32xbf16>, vector<8x32xf32> -> vector<8x32xf32>
      %c0_58 = arith.constant 0 : index
      %c0_59 = arith.constant 0 : index
      %84 = vector.load %arg7[%c0_58, %c0_59] : memref<16x32xbf16, #tpu.memory_space<vmem>>, vector<16x32xbf16>
      %cst_60 = arith.constant dense<0.000000e+00> : vector<8x32xf32>
      %85 = tpu.matmul %81, %84, %cst_60 {dimension_numbers = #tpu.dot_dimension_numbers<[1], [0], [0], [1], [0, 0, 1, 1], [], []>} : vector<8x16xbf16>, vector<16x32xbf16>, vector<8x32xf32> -> vector<8x32xf32>
      %86 = arith.truncf %83 : vector<8x32xf32> to vector<8x32xbf16>
      %87 = arith.truncf %85 : vector<8x32xf32> to vector<8x32xbf16>
      %88 = vector.extract_strided_slice %86 {offsets = [0, 0], sizes = [8, 8], strides = [1, 1]} : vector<8x32xbf16> to vector<8x8xbf16>
      %c0_61 = arith.constant 0 : index
      %c0_62 = arith.constant 0 : index
      %c0_63 = arith.constant 0 : index
      %89 = vector.load %arg13[%c0_61, %c0_62, %c0_63] : memref<4x8x8xbf16, #tpu.memory_space<vmem>>, vector<1x8x8xbf16>
      %90 = vector.shape_cast %89 : vector<1x8x8xbf16> to vector<8x8xbf16>
      %91 = vector.shape_cast %88 : vector<8x8xbf16> to vector<1x8x8xbf16>
      tpu.vector_store %arg13[%c0_61, %c0_62, %c0_63], %91 {strides = array<i32>} : memref<4x8x8xbf16, #tpu.memory_space<vmem>>, vector<1x8x8xbf16>,
      %92 = vector.extract_strided_slice %87 {offsets = [0, 0], sizes = [8, 8], strides = [1, 1]} : vector<8x32xbf16> to vector<8x8xbf16>
      %c0_64 = arith.constant 0 : index
      %c0_65 = arith.constant 0 : index
      %c0_66 = arith.constant 0 : index
      %93 = vector.load %arg14[%c0_64, %c0_65, %c0_66] : memref<4x8x8xbf16, #tpu.memory_space<vmem>>, vector<1x8x8xbf16>
      %94 = vector.shape_cast %93 : vector<1x8x8xbf16> to vector<8x8xbf16>
      %95 = vector.shape_cast %92 : vector<8x8xbf16> to vector<1x8x8xbf16>
      tpu.vector_store %arg14[%c0_64, %c0_65, %c0_66], %95 {strides = array<i32>} : memref<4x8x8xbf16, #tpu.memory_space<vmem>>, vector<1x8x8xbf16>,
      %96 = vector.extract_strided_slice %86 {offsets = [0, 8], sizes = [8, 8], strides = [1, 1]} : vector<8x32xbf16> to vector<8x8xbf16>
      %c1_67 = arith.constant 1 : index
      %c0_68 = arith.constant 0 : index
      %c0_69 = arith.constant 0 : index
      %97 = vector.load %arg13[%c1_67, %c0_68, %c0_69] : memref<4x8x8xbf16, #tpu.memory_space<vmem>>, vector<1x8x8xbf16>
      %98 = vector.shape_cast %97 : vector<1x8x8xbf16> to vector<8x8xbf16>
      %99 = vector.shape_cast %96 : vector<8x8xbf16> to vector<1x8x8xbf16>
      tpu.vector_store %arg13[%c1_67, %c0_68, %c0_69], %99 {strides = array<i32>} : memref<4x8x8xbf16, #tpu.memory_space<vmem>>, vector<1x8x8xbf16>,
      %100 = vector.extract_strided_slice %87 {offsets = [0, 8], sizes = [8, 8], strides = [1, 1]} : vector<8x32xbf16> to vector<8x8xbf16>
      %c1_70 = arith.constant 1 : index
      %c0_71 = arith.constant 0 : index
      %c0_72 = arith.constant 0 : index
      %101 = vector.load %arg14[%c1_70, %c0_71, %c0_72] : memref<4x8x8xbf16, #tpu.memory_space<vmem>>, vector<1x8x8xbf16>
      %102 = vector.shape_cast %101 : vector<1x8x8xbf16> to vector<8x8xbf16>
      %103 = vector.shape_cast %100 : vector<8x8xbf16> to vector<1x8x8xbf16>
      tpu.vector_store %arg14[%c1_70, %c0_71, %c0_72], %103 {strides = array<i32>} : memref<4x8x8xbf16, #tpu.memory_space<vmem>>, vector<1x8x8xbf16>,
      %104 = vector.extract_strided_slice %86 {offsets = [0, 16], sizes = [8, 8], strides = [1, 1]} : vector<8x32xbf16> to vector<8x8xbf16>
      %c2_73 = arith.constant 2 : index
      %c0_74 = arith.constant 0 : index
      %c0_75 = arith.constant 0 : index
      %105 = vector.load %arg13[%c2_73, %c0_74, %c0_75] : memref<4x8x8xbf16, #tpu.memory_space<vmem>>, vector<1x8x8xbf16>
      %106 = vector.shape_cast %105 : vector<1x8x8xbf16> to vector<8x8xbf16>
      %107 = vector.shape_cast %104 : vector<8x8xbf16> to vector<1x8x8xbf16>
      tpu.vector_store %arg13[%c2_73, %c0_74, %c0_75], %107 {strides = array<i32>} : memref<4x8x8xbf16, #tpu.memory_space<vmem>>, vector<1x8x8xbf16>,
      %108 = vector.extract_strided_slice %87 {offsets = [0, 16], sizes = [8, 8], strides = [1, 1]} : vector<8x32xbf16> to vector<8x8xbf16>
      %c2_76 = arith.constant 2 : index
      %c0_77 = arith.constant 0 : index
      %c0_78 = arith.constant 0 : index
      %109 = vector.load %arg14[%c2_76, %c0_77, %c0_78] : memref<4x8x8xbf16, #tpu.memory_space<vmem>>, vector<1x8x8xbf16>
      %110 = vector.shape_cast %109 : vector<1x8x8xbf16> to vector<8x8xbf16>
      %111 = vector.shape_cast %108 : vector<8x8xbf16> to vector<1x8x8xbf16>
      tpu.vector_store %arg14[%c2_76, %c0_77, %c0_78], %111 {strides = array<i32>} : memref<4x8x8xbf16, #tpu.memory_space<vmem>>, vector<1x8x8xbf16>,
      %112 = vector.extract_strided_slice %86 {offsets = [0, 24], sizes = [8, 8], strides = [1, 1]} : vector<8x32xbf16> to vector<8x8xbf16>
      %c3_79 = arith.constant 3 : index
      %c0_80 = arith.constant 0 : index
      %c0_81 = arith.constant 0 : index
      %113 = vector.load %arg13[%c3_79, %c0_80, %c0_81] : memref<4x8x8xbf16, #tpu.memory_space<vmem>>, vector<1x8x8xbf16>
      %114 = vector.shape_cast %113 : vector<1x8x8xbf16> to vector<8x8xbf16>
      %115 = vector.shape_cast %112 : vector<8x8xbf16> to vector<1x8x8xbf16>
      tpu.vector_store %arg13[%c3_79, %c0_80, %c0_81], %115 {strides = array<i32>} : memref<4x8x8xbf16, #tpu.memory_space<vmem>>, vector<1x8x8xbf16>,
      %116 = vector.extract_strided_slice %87 {offsets = [0, 24], sizes = [8, 8], strides = [1, 1]} : vector<8x32xbf16> to vector<8x8xbf16>
      %c3_82 = arith.constant 3 : index
      %c0_83 = arith.constant 0 : index
      %c0_84 = arith.constant 0 : index
      %117 = vector.load %arg14[%c3_82, %c0_83, %c0_84] : memref<4x8x8xbf16, #tpu.memory_space<vmem>>, vector<1x8x8xbf16>
      %118 = vector.shape_cast %117 : vector<1x8x8xbf16> to vector<8x8xbf16>
      %119 = vector.shape_cast %116 : vector<8x8xbf16> to vector<1x8x8xbf16>
      tpu.vector_store %arg14[%c3_82, %c0_83, %c0_84], %119 {strides = array<i32>} : memref<4x8x8xbf16, #tpu.memory_space<vmem>>, vector<1x8x8xbf16>,
    } else {
    }
    %c0 = arith.constant 0 : index
    %c0_1 = arith.constant 0 : index
    %c0_2 = arith.constant 0 : index
    %3 = vector.load %arg2[%c0, %c0_1, %c0_2] : memref<1x8x16xbf16, #tpu.memory_space<vmem>>, vector<1x8x16xbf16>
    %4 = vector.shape_cast %3 : vector<1x8x16xbf16> to vector<8x16xbf16>
    %c0_3 = arith.constant 0 : index
    %c0_4 = arith.constant 0 : index
    %5 = vector.load %arg5[%c0_3, %c0_4] : memref<16x32xbf16, #tpu.memory_space<vmem>>, vector<16x32xbf16>
    %cst = arith.constant dense<0.000000e+00> : vector<8x32xf32>
    %6 = tpu.matmul %4, %5, %cst {dimension_numbers = #tpu.dot_dimension_numbers<[1], [0], [0], [1], [0, 0, 1, 1], [], []>} : vector<8x16xbf16>, vector<16x32xbf16>, vector<8x32xf32> -> vector<8x32xf32>
    %c0_5 = arith.constant 0 : index
    %c0_6 = arith.constant 0 : index
    %7 = vector.load %arg8[%c0_5, %c0_6] : memref<16x32xbf16, #tpu.memory_space<vmem>>, vector<16x32xbf16>
    %cst_7 = arith.constant dense<0.000000e+00> : vector<8x32xf32>
    %8 = tpu.matmul %4, %7, %cst_7 {dimension_numbers = #tpu.dot_dimension_numbers<[1], [0], [0], [1], [0, 0, 1, 1], [], []>} : vector<8x16xbf16>, vector<16x32xbf16>, vector<8x32xf32> -> vector<8x32xf32>
    %c0_8 = arith.constant 0 : index
    %c0_9 = arith.constant 0 : index
    %9 = vector.load %arg9[%c0_8, %c0_9] : memref<1x32xf32, #tpu.memory_space<vmem>>, vector<1x32xf32>
    %10 = vector.broadcast %9 : vector<1x32xf32> to vector<8x32xf32>
    %11 = arith.addf %8, %10 : vector<8x32xf32>
    %12 = arith.negf %11 : vector<8x32xf32>
    %13 = math.exp %12 : vector<8x32xf32>
    %cst_10 = arith.constant 1.000000e+00 : f32
    %14 = vector.broadcast %cst_10 : f32 to vector<8x32xf32>
    %15 = arith.addf %14, %13 : vector<8x32xf32>
    %16 = arith.divf %14, %15 : vector<8x32xf32>
    %17 = arith.truncf %6 : vector<8x32xf32> to vector<8x32xbf16>
    %18 = vector.extract_strided_slice %17 {offsets = [0, 0], sizes = [8, 8], strides = [1, 1]} : vector<8x32xbf16> to vector<8x8xbf16>
    %c0_11 = arith.constant 0 : index
    %c0_12 = arith.constant 0 : index
    %c0_13 = arith.constant 0 : index
    %19 = vector.load %arg15[%c0_11, %c0_12, %c0_13] : memref<4x8x8xbf16, #tpu.memory_space<vmem>>, vector<1x8x8xbf16>
    %20 = vector.shape_cast %19 : vector<1x8x8xbf16> to vector<8x8xbf16>
    %21 = vector.shape_cast %18 : vector<8x8xbf16> to vector<1x8x8xbf16>
    tpu.vector_store %arg15[%c0_11, %c0_12, %c0_13], %21 {strides = array<i32>} : memref<4x8x8xbf16, #tpu.memory_space<vmem>>, vector<1x8x8xbf16>,
    %22 = vector.extract_strided_slice %17 {offsets = [0, 8], sizes = [8, 8], strides = [1, 1]} : vector<8x32xbf16> to vector<8x8xbf16>
    %c1 = arith.constant 1 : index
    %c0_14 = arith.constant 0 : index
    %c0_15 = arith.constant 0 : index
    %23 = vector.load %arg15[%c1, %c0_14, %c0_15] : memref<4x8x8xbf16, #tpu.memory_space<vmem>>, vector<1x8x8xbf16>
    %24 = vector.shape_cast %23 : vector<1x8x8xbf16> to vector<8x8xbf16>
    %25 = vector.shape_cast %22 : vector<8x8xbf16> to vector<1x8x8xbf16>
    tpu.vector_store %arg15[%c1, %c0_14, %c0_15], %25 {strides = array<i32>} : memref<4x8x8xbf16, #tpu.memory_space<vmem>>, vector<1x8x8xbf16>,
    %26 = vector.extract_strided_slice %17 {offsets = [0, 16], sizes = [8, 8], strides = [1, 1]} : vector<8x32xbf16> to vector<8x8xbf16>
    %c2 = arith.constant 2 : index
    %c0_16 = arith.constant 0 : index
    %c0_17 = arith.constant 0 : index
    %27 = vector.load %arg15[%c2, %c0_16, %c0_17] : memref<4x8x8xbf16, #tpu.memory_space<vmem>>, vector<1x8x8xbf16>
    %28 = vector.shape_cast %27 : vector<1x8x8xbf16> to vector<8x8xbf16>
    %29 = vector.shape_cast %26 : vector<8x8xbf16> to vector<1x8x8xbf16>
    tpu.vector_store %arg15[%c2, %c0_16, %c0_17], %29 {strides = array<i32>} : memref<4x8x8xbf16, #tpu.memory_space<vmem>>, vector<1x8x8xbf16>,
    %30 = vector.extract_strided_slice %17 {offsets = [0, 24], sizes = [8, 8], strides = [1, 1]} : vector<8x32xbf16> to vector<8x8xbf16>
    %c3 = arith.constant 3 : index
    %c0_18 = arith.constant 0 : index
    %c0_19 = arith.constant 0 : index
    %31 = vector.load %arg15[%c3, %c0_18, %c0_19] : memref<4x8x8xbf16, #tpu.memory_space<vmem>>, vector<1x8x8xbf16>
    %32 = vector.shape_cast %31 : vector<1x8x8xbf16> to vector<8x8xbf16>
    %33 = vector.shape_cast %30 : vector<8x8xbf16> to vector<1x8x8xbf16>
    tpu.vector_store %arg15[%c3, %c0_18, %c0_19], %33 {strides = array<i32>} : memref<4x8x8xbf16, #tpu.memory_space<vmem>>, vector<1x8x8xbf16>,
    %c0_20 = arith.constant 0 : index
    %c0_21 = arith.constant 0 : index
    %c0_22 = arith.constant 0 : index
    %34 = vector.load %arg15[%c0_20, %c0_21, %c0_22] : memref<4x8x8xbf16, #tpu.memory_space<vmem>>, vector<4x8x8xbf16>
    %c0_23 = arith.constant 0 : index
    %c0_24 = arith.constant 0 : index
    %c0_25 = arith.constant 0 : index
    %35 = vector.load %arg13[%c0_23, %c0_24, %c0_25] : memref<4x8x8xbf16, #tpu.memory_space<vmem>>, vector<4x8x8xbf16>
    "tpu.trace_start"() <{level = 10 : i32, message = "hqc,hkc->hqk"}> : () -> ()
    %cst_26 = arith.constant dense<0.000000e+00> : vector<4x8x8xf32>
    %36 = tpu.matmul %34, %35, %cst_26 {dimension_numbers = #tpu.dot_dimension_numbers<[2], [2], [1], [1], [0, 0, 0, 1, 1, 1], [0], [0]>} : vector<4x8x8xbf16>, vector<4x8x8xbf16>, vector<4x8x8xf32> -> vector<4x8x8xf32>
    "tpu.trace_stop"() : () -> ()
    %c0_27 = arith.constant 0 : index
    %c0_28 = arith.constant 0 : index
    %c0_29 = arith.constant 0 : index
    %c0_30 = arith.constant 0 : index
    %37 = vector.load %arg4[%c0_27, %c0_28, %c0_29, %c0_30] : memref<1x1x8x8xbf16, #tpu.memory_space<vmem>>, vector<1x1x8x8xbf16>
    %38 = vector.shape_cast %37 : vector<1x1x8x8xbf16> to vector<1x8x8xbf16>
    %39 = arith.extf %38 : vector<1x8x8xbf16> to vector<1x8x8xf32>
    %40 = vector.broadcast %39 : vector<1x8x8xf32> to vector<4x8x8xf32>
    %41 = arith.addf %36, %40 : vector<4x8x8xf32>
    %cst_31 = arith.constant dense<0xFF800000> : vector<4x8xf32>
    %42 = vector.multi_reduction <maximumf>, %41, %cst_31 [2] : vector<4x8x8xf32> to vector<4x8xf32>
    %43 = vector.shape_cast %42 : vector<4x8xf32> to vector<4x8x1xf32>
    %44 = vector.broadcast %43 : vector<4x8x1xf32> to vector<4x8x8xf32>
    %45 = arith.subf %41, %44 : vector<4x8x8xf32>
    %46 = math.exp %45 : vector<4x8x8xf32>
    %cst_32 = arith.constant dense<0.000000e+00> : vector<4x8xf32>
    %47 = vector.multi_reduction <add>, %46, %cst_32 [2] : vector<4x8x8xf32> to vector<4x8xf32>
    %48 = vector.shape_cast %47 : vector<4x8xf32> to vector<4x8x1xf32>
    %49 = arith.truncf %46 : vector<4x8x8xf32> to vector<4x8x8xbf16>
    %c0_33 = arith.constant 0 : index
    %c0_34 = arith.constant 0 : index
    %c0_35 = arith.constant 0 : index
    %50 = vector.load %arg14[%c0_33, %c0_34, %c0_35] : memref<4x8x8xbf16, #tpu.memory_space<vmem>>, vector<4x8x8xbf16>
    "tpu.trace_start"() <{level = 10 : i32, message = "hqk,hkc->hqc"}> : () -> ()
    %cst_36 = arith.constant dense<0.000000e+00> : vector<4x8x8xf32>
    %51 = tpu.matmul %49, %50, %cst_36 {dimension_numbers = #tpu.dot_dimension_numbers<[2], [1], [1], [2], [0, 0, 0, 1, 1, 2], [0], [0]>} : vector<4x8x8xbf16>, vector<4x8x8xbf16>, vector<4x8x8xf32> -> vector<4x8x8xf32>
    "tpu.trace_stop"() : () -> ()
    %52 = tpu.reciprocal %48 {approx = true} : vector<4x8x1xf32> -> vector<4x8x1xf32>
    %53 = vector.broadcast %52 : vector<4x8x1xf32> to vector<4x8x8xf32>
    %54 = arith.mulf %51, %53 : vector<4x8x8xf32>
    %55 = vector.extract_strided_slice %54 {offsets = [0, 0, 0], sizes = [1, 8, 8], strides = [1, 1, 1]} : vector<4x8x8xf32> to vector<1x8x8xf32>
    %56 = vector.shape_cast %55 : vector<1x8x8xf32> to vector<8x8xf32>
    %c0_37 = arith.constant 0 : index
    %c0_38 = arith.constant 0 : index
    %57 = vector.load %arg16[%c0_37, %c0_38] : memref<8x32xf32, #tpu.memory_space<vmem>>, vector<8x8xf32>
    tpu.vector_store %arg16[%c0_37, %c0_38], %56 {strides = array<i32>} : memref<8x32xf32, #tpu.memory_space<vmem>>, vector<8x8xf32>,
    %58 = vector.extract_strided_slice %54 {offsets = [1, 0, 0], sizes = [1, 8, 8], strides = [1, 1, 1]} : vector<4x8x8xf32> to vector<1x8x8xf32>
    %59 = vector.shape_cast %58 : vector<1x8x8xf32> to vector<8x8xf32>
    %c0_39 = arith.constant 0 : index
    %c8 = arith.constant 8 : index
    %60 = vector.load %arg16[%c0_39, %c8] : memref<8x32xf32, #tpu.memory_space<vmem>>, vector<8x8xf32>
    tpu.vector_store %arg16[%c0_39, %c8], %59 {strides = array<i32>} : memref<8x32xf32, #tpu.memory_space<vmem>>, vector<8x8xf32>,
    %61 = vector.extract_strided_slice %54 {offsets = [2, 0, 0], sizes = [1, 8, 8], strides = [1, 1, 1]} : vector<4x8x8xf32> to vector<1x8x8xf32>
    %62 = vector.shape_cast %61 : vector<1x8x8xf32> to vector<8x8xf32>
    %c0_40 = arith.constant 0 : index
    %c16 = arith.constant 16 : index
    %63 = vector.load %arg16[%c0_40, %c16] : memref<8x32xf32, #tpu.memory_space<vmem>>, vector<8x8xf32>
    tpu.vector_store %arg16[%c0_40, %c16], %62 {strides = array<i32>} : memref<8x32xf32, #tpu.memory_space<vmem>>, vector<8x8xf32>,
    %64 = vector.extract_strided_slice %54 {offsets = [3, 0, 0], sizes = [1, 8, 8], strides = [1, 1, 1]} : vector<4x8x8xf32> to vector<1x8x8xf32>
    %65 = vector.shape_cast %64 : vector<1x8x8xf32> to vector<8x8xf32>
    %c0_41 = arith.constant 0 : index
    %c24 = arith.constant 24 : index
    %66 = vector.load %arg16[%c0_41, %c24] : memref<8x32xf32, #tpu.memory_space<vmem>>, vector<8x8xf32>
    tpu.vector_store %arg16[%c0_41, %c24], %65 {strides = array<i32>} : memref<8x32xf32, #tpu.memory_space<vmem>>, vector<8x8xf32>,
    %c0_42 = arith.constant 0 : index
    %c0_43 = arith.constant 0 : index
    %67 = vector.load %arg16[%c0_42, %c0_43] : memref<8x32xf32, #tpu.memory_space<vmem>>, vector<8x32xf32>
    %68 = arith.mulf %67, %16 : vector<8x32xf32>
    %69 = arith.truncf %68 : vector<8x32xf32> to vector<8x32xbf16>
    %c0_44 = arith.constant 0 : index
    %c0_45 = arith.constant 0 : index
    %70 = vector.load %arg10[%c0_44, %c0_45] : memref<32x16xbf16, #tpu.memory_space<vmem>>, vector<32x16xbf16>
    %cst_46 = arith.constant dense<0.000000e+00> : vector<8x16xf32>
    %71 = tpu.matmul %69, %70, %cst_46 {dimension_numbers = #tpu.dot_dimension_numbers<[1], [0], [0], [1], [0, 0, 1, 1], [], []>} : vector<8x32xbf16>, vector<32x16xbf16>, vector<8x16xf32> -> vector<8x16xf32>
    %c0_47 = arith.constant 0 : index
    %c0_48 = arith.constant 0 : index
    %72 = vector.load %arg11[%c0_47, %c0_48] : memref<1x16xf32, #tpu.memory_space<vmem>>, vector<1x16xf32>
    %73 = vector.shape_cast %72 : vector<1x16xf32> to vector<16xf32>
    %74 = vector.shape_cast %73 : vector<16xf32> to vector<1x16xf32>
    %75 = vector.broadcast %74 : vector<1x16xf32> to vector<8x16xf32>
    %76 = arith.addf %71, %75 : vector<8x16xf32>
    %c0_49 = arith.constant 0 : index
    %c0_50 = arith.constant 0 : index
    %c0_51 = arith.constant 0 : index
    %77 = vector.load %arg12[%c0_49, %c0_50, %c0_51] : memref<1x8x16xf32, #tpu.memory_space<vmem>>, vector<1x8x16xf32>
    %78 = vector.shape_cast %77 : vector<1x8x16xf32> to vector<8x16xf32>
    %79 = vector.shape_cast %76 : vector<8x16xf32> to vector<1x8x16xf32>
    tpu.vector_store %arg12[%c0_49, %c0_50, %c0_51], %79 {strides = array<i32>} : memref<1x8x16xf32, #tpu.memory_space<vmem>>, vector<1x8x16xf32>,
    return
  }
  func.func @transform_0(%arg0: i32, %arg1: i32) -> (i32, i32, i32) {
    %c0_i32 = arith.constant 0 : i32
    %c0_i32_0 = arith.constant 0 : i32
    return %arg0, %arg1, %c0_i32 : i32, i32, i32
  }
  func.func @transform_1(%arg0: i32, %arg1: i32) -> (i32, i32, i32) {
    %c0_i32 = arith.constant 0 : i32
    %c0_i32_0 = arith.constant 0 : i32
    %c0_i32_1 = arith.constant 0 : i32
    return %arg0, %c0_i32, %c0_i32_0 : i32, i32, i32
  }
  func.func @transform_2(%arg0: i32, %arg1: i32) -> (i32, i32, i32, i32) {
    %c0_i32 = arith.constant 0 : i32
    %c0_i32_0 = arith.constant 0 : i32
    %c0_i32_1 = arith.constant 0 : i32
    return %arg0, %c0_i32, %arg1, %c0_i32_0 : i32, i32, i32, i32
  }
  func.func @transform_3(%arg0: i32, %arg1: i32) -> (i32, i32) {
    %c0_i32 = arith.constant 0 : i32
    %c0_i32_0 = arith.constant 0 : i32
    %c0_i32_1 = arith.constant 0 : i32
    return %c0_i32, %c0_i32_0 : i32, i32
  }
  func.func @transform_4(%arg0: i32, %arg1: i32) -> (i32, i32) {
    %c0_i32 = arith.constant 0 : i32
    %c0_i32_0 = arith.constant 0 : i32
    %c0_i32_1 = arith.constant 0 : i32
    return %c0_i32, %c0_i32_0 : i32, i32
  }
  func.func @transform_5(%arg0: i32, %arg1: i32) -> (i32, i32) {
    %c0_i32 = arith.constant 0 : i32
    %c0_i32_0 = arith.constant 0 : i32
    %c0_i32_1 = arith.constant 0 : i32
    return %c0_i32, %c0_i32_0 : i32, i32
  }
  func.func @transform_6(%arg0: i32, %arg1: i32) -> (i32, i32) {
    %c0_i32 = arith.constant 0 : i32
    %c0_i32_0 = arith.constant 0 : i32
    %c0_i32_1 = arith.constant 0 : i32
    return %c0_i32, %c0_i32_0 : i32, i32
  }
  func.func @transform_7(%arg0: i32, %arg1: i32) -> (i32, i32) {
    %c0_i32 = arith.constant 0 : i32
    %c0_i32_0 = arith.constant 0 : i32
    %c0_i32_1 = arith.constant 0 : i32
    return %c0_i32, %c0_i32_0 : i32, i32
  }
  func.func @transform_8(%arg0: i32, %arg1: i32) -> (i32, i32) {
    %c0_i32 = arith.constant 0 : i32
    %c0_i32_0 = arith.constant 0 : i32
    %c0_i32_1 = arith.constant 0 : i32
    return %c0_i32, %c0_i32_0 : i32, i32
  }
  func.func @transform_9(%arg0: i32, %arg1: i32) -> (i32, i32) {
    %c0_i32 = arith.constant 0 : i32
    %c0_i32_0 = arith.constant 0 : i32
    %c0_i32_1 = arith.constant 0 : i32
    return %c0_i32, %c0_i32_0 : i32, i32
  }
  func.func @transform_10(%arg0: i32, %arg1: i32) -> (i32, i32, i32) {
    %c0_i32 = arith.constant 0 : i32
    %c0_i32_0 = arith.constant 0 : i32
    return %arg0, %arg1, %c0_i32 : i32, i32, i32
  }
}

</mosaic_0001>

<llo_original>
// kernel: tpu_custom_call.1
$region0: #{tpu_custom_call.1}
  #allocation0 [shape = 'u32[]', space=smem, size = 0x4, offset = 0x4, fixed_abs, tag = 'smem constant byte address 0x4 - core index']
  #allocation1 [shape = 'u32[144,128]{1,0:T(1,128)}', space=vmem, size = 0x12000, scoped, tag = 'internal scratch']
  #allocation2 [shape = 'bf16[4,8,8]{2,1,0:T(8,128)(2,1)}', space=vmem, size = 0x2000, scoped, tag = 'scratch operand']
  #allocation3 [shape = 'bf16[4,8,8]{2,1,0:T(8,128)(2,1)}', space=vmem, size = 0x2000, scoped, tag = 'scratch operand']
  #allocation4 [shape = 'bf16[4,8,8]{2,1,0:T(8,128)(2,1)}', space=vmem, size = 0x2000, scoped, tag = 'scratch operand']
  #allocation5 [shape = 'f32[8,32]{1,0:T(8,128)}', space=vmem, size = 0x1000, scoped, tag = 'scratch operand']
  %s0 = inlined_call_operand.vmem [shape: bf16[2,8,16], index: 0, kind: input, shape index: {}]
  %s1 = inlined_call_operand.vmem [shape: bf16[2,8,16], index: 1, kind: input, shape index: {}]
  %s2 = inlined_call_operand.vmem [shape: bf16[2,1,8,8], index: 2, kind: input, shape index: {}]
  %s3 = inlined_call_operand.hbm [shape: bf16[16,32], index: 3, kind: input, shape index: {}]
  %s4 = inlined_call_operand.hbm [shape: bf16[16,32], index: 4, kind: input, shape index: {}]
  %s5 = inlined_call_operand.vmem [shape: bf16[16,32], index: 5, kind: input, shape index: {}]
  %s6 = inlined_call_operand.hbm [shape: bf16[16,32], index: 6, kind: input, shape index: {}]
  %s7 = inlined_call_operand.vmem [shape: f32[1,32], index: 7, kind: input, shape index: {}]
  %s8 = inlined_call_operand.vmem [shape: bf16[32,16], index: 8, kind: input, shape index: {}]
  %s9 = inlined_call_operand.vmem [shape: f32[1,16], index: 9, kind: input, shape index: {}]
  %s10 = inlined_call_operand.hbm [shape: f32[2,8,16], index: 10, kind: output, shape index: {}]
  %s11 = sld [smem:[#allocation0]]
  $region89: #{tpu_custom_call.1} parent=0
    _
  %s13 = ssub.s32 1, %s11
  %s14 = scalar_select 0, %s13, %s11
  $region1: #{tpu_custom_call.1} parent=0
    #allocation6 [shape = 'u8[4096]{0}', space=vmem, size = 0x1000, scoped, tag = 'input window, operand 3, single buffered']
    #allocation7 [shape = 's32[2]{0}', space=sflag, size = 0x8, scoped, tag = 'scoped memory for tpu_custom_call.1']
    #allocation8 [shape = 's32[2]{0}', space=sflag, size = 0x8, scoped, tag = 'scoped memory for tpu_custom_call.1']
    #allocation9 [shape = 'u8[4096]{0}', space=vmem, size = 0x1000, scoped, tag = 'input window, operand 4, single buffered']
    #allocation10 [shape = 's32[1]{0}', space=sflag, size = 0x4, scoped, tag = 'scoped memory for tpu_custom_call.1']
    #allocation11 [shape = 'u8[4096]{0}', space=vmem, size = 0x1000, scoped, tag = 'input window, operand 6, single buffered']
    #allocation12 [shape = 'u8[8192]{0}', space=vmem, size = 0x2000, scoped, tag = 'output window, operand 0']
    %15 = vsyncpa [#allocation7], 0
    %16 = vsyncpa [#allocation10], 0
    %17 = vsyncpa [#allocation8], 0
    %s18 = scalar_lea.sflag [#allocation8], 1
    %19 = vsyncpa %s18, 0
    loop: start=0, step=1, limit=4
    $region2: #{tpu_custom_call.1} parent=1 // loop_pre_header
      _
    $region3: #{tpu_custom_call.1} parent=1 // loop_header
      %s21 = sphi 0, %s25
      %p22 = scmp.ge.s32.totalorder %s21, 4
      %s28 = sphi 0, %s40
      %s29 = sphi 0, %s36
      %s30 = sphi 0, %s28
      %s31 = sphi 0, %s29
      %s32 = sphi 0, %s30
      %s33 = sphi 0, %s31
      %s45 = sphi 0, %s47
      %s48 = sphi 0, %s45
      %s49 = sphi 0, %s48
      %s65 = sphi 0, %s49
      %s71 = sphi 0, %s73
      %s74 = sphi 0, %s71
      %s75 = sphi 0, %s74
      %s91 = sphi 0, %s75
      %s99 = sphi 0, %s101
      %s102 = sphi 0, %s99
      %s103 = sphi 0, %s102
      %s119 = sphi 0, %s103
      %s123 = sphi 0, %s123
      %s125 = sphi 0, %s123
      %s126 = sphi 0, %s125
      %s140 = sphi 0, %s126
      %s144 = sphi 0, %s144
      %s146 = sphi 0, %s144
      %s147 = sphi 0, %s146
      %s161 = sphi 0, %s147
      %s165 = sphi 0, %s165
      %s167 = sphi 0, %s165
      %s168 = sphi 0, %s167
      %s182 = sphi 0, %s168
      %s186 = sphi 0, %s186
      %s188 = sphi 0, %s186
      %s189 = sphi 0, %s188
      %s203 = sphi 0, %s189
      %s207 = sphi 0, %s207
      %s209 = sphi 0, %s207
      %s210 = sphi 0, %s209
      %s224 = sphi 0, %s210
      %s228 = sphi 0, %s228
      %s230 = sphi 0, %s228
      %s231 = sphi 0, %s230
      %s245 = sphi 0, %s231
      %s249 = sphi 0, %s249
      %s251 = sphi 0, %s249
      %s252 = sphi 0, %s251
      %s266 = sphi 0, %s252
      %s274 = sphi 0, %s276
      %s277 = sphi 0, %s274
      %s278 = sphi 0, %s277
      %s294 = sphi 0, %s278
    $region4: #{tpu_custom_call.1} parent=1 // loop_header_branch
      %24 = sbr.rel (%p22) target = $region8
    $region5: #{tpu_custom_call.1} parent=1 // loop_body
      %s26 = ssub.s32 %s21, 1
      %s27 = ssub.s32 %s21, 2
      %s34 = sadd.s32 1, %s29
      %p35 = scmp.ge.s32.totalorder %s34, 1
      %s36 = scalar_select %p35, 0, %s34
      %s37 = sadd.s32 1, %s28
      %s38 = scalar_select %p35, %s37, %s28
      %p39 = scmp.ge.s32.totalorder %s38, 2
      %s40 = scalar_select %p39, 0, %s38
      %s41 = ssub.s32 %s28, %s40
      %s42 = ssub.s32 %s29, %s36
      %s43 = sor.u32 %s41, %s42
      %p44 = scmp.eq.s32.totalorder %s43, 0
      %s46 = sadd.s32 %s45, 1
      %s47 = scalar_select %p44, %s45, %s46
      %p50 = pneg %p44
      %p51 = scmp.eq.s32.totalorder %s21, 1
      %p52 = por %p50, %p51
      %p53 = scmp.ne.s32.totalorder %s45, %s48
      %p54 = scmp.eq.s32.totalorder %s21, 0
      %p55 = por %p53, %p54
      %p56 = scmp.ne.s32.totalorder %s45, %s48
      %p57 = scmp.eq.s32.totalorder %s26, 1
      %p58 = por %p56, %p57
      %p59 = scmp.ne.s32.totalorder %s48, %s49
      %p60 = scmp.eq.s32.totalorder %s26, 0
      %p61 = por %p59, %p60
      %p62 = scmp.ne.s32.totalorder %s48, %s49
      %p63 = scmp.eq.s32.totalorder %s27, 1
      %p64 = por %p62, %p63
      %p66 = scmp.ne.s32.totalorder %s49, %s65
      %p67 = scmp.eq.s32.totalorder %s27, 0
      %p68 = por %p66, %p67
      %s69 = ssub.s32 %s28, %s40
      %p70 = scmp.eq.s32.totalorder %s69, 0
      %s72 = sadd.s32 %s71, 1
      %s73 = scalar_select %p70, %s71, %s72
      %p76 = pneg %p70
      %p77 = scmp.eq.s32.totalorder %s21, 1
      %p78 = por %p76, %p77
      %p79 = scmp.ne.s32.totalorder %s71, %s74
      %p80 = scmp.eq.s32.totalorder %s21, 0
      %p81 = por %p79, %p80
      %p82 = scmp.ne.s32.totalorder %s71, %s74
      %p83 = scmp.eq.s32.totalorder %s26, 1
      %p84 = por %p82, %p83
      %p85 = scmp.ne.s32.totalorder %s74, %s75
      %p86 = scmp.eq.s32.totalorder %s26, 0
      %p87 = por %p85, %p86
      %p88 = scmp.ne.s32.totalorder %s74, %s75
      %p89 = scmp.eq.s32.totalorder %s27, 1
      %p90 = por %p88, %p89
      %p92 = scmp.ne.s32.totalorder %s75, %s91
      %p93 = scmp.eq.s32.totalorder %s27, 0
      %p94 = por %p92, %p93
      %s95 = ssub.s32 %s28, %s40
      %s96 = ssub.s32 %s29, %s36
      %s97 = sor.u32 %s95, %s96
      %p98 = scmp.eq.s32.totalorder %s97, 0
      %s100 = sadd.s32 %s99, 1
      %s101 = scalar_select %p98, %s99, %s100
      %p104 = pneg %p98
      %p105 = scmp.eq.s32.totalorder %s21, 1
      %p106 = por %p104, %p105
      %p107 = scmp.ne.s32.totalorder %s99, %s102
      %p108 = scmp.eq.s32.totalorder %s21, 0
      %p109 = por %p107, %p108
      %p110 = scmp.ne.s32.totalorder %s99, %s102
      %p111 = scmp.eq.s32.totalorder %s26, 1
      %p112 = por %p110, %p111
      %p113 = scmp.ne.s32.totalorder %s102, %s103
      %p114 = scmp.eq.s32.totalorder %s26, 0
      %p115 = por %p113, %p114
      %p116 = scmp.ne.s32.totalorder %s102, %s103
      %p117 = scmp.eq.s32.totalorder %s27, 1
      %p118 = por %p116, %p117
      %p120 = scmp.ne.s32.totalorder %s103, %s119
      %p121 = scmp.eq.s32.totalorder %s27, 0
      %p122 = por %p120, %p121
      %s124 = sadd.s32 %s123, 1
      %p127 = scmp.eq.s32.totalorder %s21, 1
      %p128 = scmp.ne.s32.totalorder %s123, %s125
      %p129 = scmp.eq.s32.totalorder %s21, 0
      %p130 = por %p128, %p129
      %p131 = scmp.ne.s32.totalorder %s123, %s125
      %p132 = scmp.eq.s32.totalorder %s26, 1
      %p133 = por %p131, %p132
      %p134 = scmp.ne.s32.totalorder %s125, %s126
      %p135 = scmp.eq.s32.totalorder %s26, 0
      %p136 = por %p134, %p135
      %p137 = scmp.ne.s32.totalorder %s125, %s126
      %p138 = scmp.eq.s32.totalorder %s27, 1
      %p139 = por %p137, %p138
      %p141 = scmp.ne.s32.totalorder %s126, %s140
      %p142 = scmp.eq.s32.totalorder %s27, 0
      %p143 = por %p141, %p142
      %s145 = sadd.s32 %s144, 1
      %p148 = scmp.eq.s32.totalorder %s21, 1
      %p149 = scmp.ne.s32.totalorder %s144, %s146
      %p150 = scmp.eq.s32.totalorder %s21, 0
      %p151 = por %p149, %p150
      %p152 = scmp.ne.s32.totalorder %s144, %s146
      %p153 = scmp.eq.s32.totalorder %s26, 1
      %p154 = por %p152, %p153
      %p155 = scmp.ne.s32.totalorder %s146, %s147
      %p156 = scmp.eq.s32.totalorder %s26, 0
      %p157 = por %p155, %p156
      %p158 = scmp.ne.s32.totalorder %s146, %s147
      %p159 = scmp.eq.s32.totalorder %s27, 1
      %p160 = por %p158, %p159
      %p162 = scmp.ne.s32.totalorder %s147, %s161
      %p163 = scmp.eq.s32.totalorder %s27, 0
      %p164 = por %p162, %p163
      %s166 = sadd.s32 %s165, 1
      %p169 = scmp.eq.s32.totalorder %s21, 1
      %p170 = scmp.ne.s32.totalorder %s165, %s167
      %p171 = scmp.eq.s32.totalorder %s21, 0
      %p172 = por %p170, %p171
      %p173 = scmp.ne.s32.totalorder %s165, %s167
      %p174 = scmp.eq.s32.totalorder %s26, 1
      %p175 = por %p173, %p174
      %p176 = scmp.ne.s32.totalorder %s167, %s168
      %p177 = scmp.eq.s32.totalorder %s26, 0
      %p178 = por %p176, %p177
      %p179 = scmp.ne.s32.totalorder %s167, %s168
      %p180 = scmp.eq.s32.totalorder %s27, 1
      %p181 = por %p179, %p180
      %p183 = scmp.ne.s32.totalorder %s168, %s182
      %p184 = scmp.eq.s32.totalorder %s27, 0
      %p185 = por %p183, %p184
      %s187 = sadd.s32 %s186, 1
      %p190 = scmp.eq.s32.totalorder %s21, 1
      %p191 = scmp.ne.s32.totalorder %s186, %s188
      %p192 = scmp.eq.s32.totalorder %s21, 0
      %p193 = por %p191, %p192
      %p194 = scmp.ne.s32.totalorder %s186, %s188
      %p195 = scmp.eq.s32.totalorder %s26, 1
      %p196 = por %p194, %p195
      %p197 = scmp.ne.s32.totalorder %s188, %s189
      %p198 = scmp.eq.s32.totalorder %s26, 0
      %p199 = por %p197, %p198
      %p200 = scmp.ne.s32.totalorder %s188, %s189
      %p201 = scmp.eq.s32.totalorder %s27, 1
      %p202 = por %p200, %p201
      %p204 = scmp.ne.s32.totalorder %s189, %s203
      %p205 = scmp.eq.s32.totalorder %s27, 0
      %p206 = por %p204, %p205
      %s208 = sadd.s32 %s207, 1
      %p211 = scmp.eq.s32.totalorder %s21, 1
      %p212 = scmp.ne.s32.totalorder %s207, %s209
      %p213 = scmp.eq.s32.totalorder %s21, 0
      %p214 = por %p212, %p213
      %p215 = scmp.ne.s32.totalorder %s207, %s209
      %p216 = scmp.eq.s32.totalorder %s26, 1
      %p217 = por %p215, %p216
      %p218 = scmp.ne.s32.totalorder %s209, %s210
      %p219 = scmp.eq.s32.totalorder %s26, 0
      %p220 = por %p218, %p219
      %p221 = scmp.ne.s32.totalorder %s209, %s210
      %p222 = scmp.eq.s32.totalorder %s27, 1
      %p223 = por %p221, %p222
      %p225 = scmp.ne.s32.totalorder %s210, %s224
      %p226 = scmp.eq.s32.totalorder %s27, 0
      %p227 = por %p225, %p226
      %s229 = sadd.s32 %s228, 1
      %p232 = scmp.eq.s32.totalorder %s21, 1
      %p233 = scmp.ne.s32.totalorder %s228, %s230
      %p234 = scmp.eq.s32.totalorder %s21, 0
      %p235 = por %p233, %p234
      %p236 = scmp.ne.s32.totalorder %s228, %s230
      %p237 = scmp.eq.s32.totalorder %s26, 1
      %p238 = por %p236, %p237
      %p239 = scmp.ne.s32.totalorder %s230, %s231
      %p240 = scmp.eq.s32.totalorder %s26, 0
      %p241 = por %p239, %p240
      %p242 = scmp.ne.s32.totalorder %s230, %s231
      %p243 = scmp.eq.s32.totalorder %s27, 1
      %p244 = por %p242, %p243
      %p246 = scmp.ne.s32.totalorder %s231, %s245
      %p247 = scmp.eq.s32.totalorder %s27, 0
      %p248 = por %p246, %p247
      %s250 = sadd.s32 %s249, 1
      %p253 = scmp.eq.s32.totalorder %s21, 1
      %p254 = scmp.ne.s32.totalorder %s249, %s251
      %p255 = scmp.eq.s32.totalorder %s21, 0
      %p256 = por %p254, %p255
      %p257 = scmp.ne.s32.totalorder %s249, %s251
      %p258 = scmp.eq.s32.totalorder %s26, 1
      %p259 = por %p257, %p258
      %p260 = scmp.ne.s32.totalorder %s251, %s252
      %p261 = scmp.eq.s32.totalorder %s26, 0
      %p262 = por %p260, %p261
      %p263 = scmp.ne.s32.totalorder %s251, %s252
      %p264 = scmp.eq.s32.totalorder %s27, 1
      %p265 = por %p263, %p264
      %p267 = scmp.ne.s32.totalorder %s252, %s266
      %p268 = scmp.eq.s32.totalorder %s27, 0
      %p269 = por %p267, %p268
      %s270 = ssub.s32 %s28, %s40
      %s271 = ssub.s32 %s29, %s36
      %s272 = sor.u32 %s270, %s271
      %p273 = scmp.eq.s32.totalorder %s272, 0
      %s275 = sadd.s32 %s274, 1
      %s276 = scalar_select %p273, %s274, %s275
      %p279 = pneg %p273
      %p280 = scmp.eq.s32.totalorder %s21, 1
      %p281 = por %p279, %p280
      %p282 = scmp.ne.s32.totalorder %s274, %s277
      %p283 = scmp.eq.s32.totalorder %s21, 0
      %p284 = por %p282, %p283
      %p285 = scmp.ne.s32.totalorder %s274, %s277
      %p286 = scmp.eq.s32.totalorder %s26, 1
      %p287 = por %p285, %p286
      %p288 = scmp.ne.s32.totalorder %s277, %s278
      %p289 = scmp.eq.s32.totalorder %s26, 0
      %p290 = por %p288, %p289
      %p291 = scmp.ne.s32.totalorder %s277, %s278
      %p292 = scmp.eq.s32.totalorder %s27, 1
      %p293 = por %p291, %p292
      %p295 = scmp.ne.s32.totalorder %s278, %s294
      %p296 = scmp.eq.s32.totalorder %s27, 0
      %p297 = por %p295, %p296
      %p298 = scmp.le.s32.totalorder 1, %s21
      %p299 = scmp.lt.s32.totalorder %s21, 3
      %p300 = pnand %p298, %p299
      %p301 = pneg %p300
      // Predicated region
      $region9: #{tpu_custom_call.1} parent=5 // pred_check
        _
      $region10: #{tpu_custom_call.1} parent=5 // pred_check_branch
        %303 = sbr.rel (%p300) target = $region12
      $region11: #{tpu_custom_call.1} parent=5 // pred_region
        %s304 = ssub.s32 %s21, 1
        // Predicated region
        $region13: #{tpu_custom_call.1} parent=11 // pred_check
          %p305 = pneg %p136
        $region14: #{tpu_custom_call.1} parent=11 // pred_check_branch
          %307 = sbr.rel (%p305) target = $region16
        $region15: #{tpu_custom_call.1} parent=11 // pred_region
          %s309 = ssub.s32 128, 128
          %310 = vsyncadd [#allocation7], %s309
          %s311 = sshll.u32 [#allocation6], 4
          %s312 = int_to_ptr.vmem [resolvable:$true] %s311
          %317 = dma.hbm_to_vmem [thread:$0]  %s3, 128, %s312, [#allocation7], 64, 64, 4
        $region16: #{tpu_custom_call.1} parent=11 // pred_fallthru
          _
        // Predicated region
        $region17: #{tpu_custom_call.1} parent=11 // pred_check
          %p318 = pneg %p157
        $region18: #{tpu_custom_call.1} parent=11 // pred_check_branch
          %320 = sbr.rel (%p318) target = $region20
        $region19: #{tpu_custom_call.1} parent=11 // pred_region
          %s322 = ssub.s32 128, 128
          %323 = vsyncadd [#allocation10], %s322
          %s324 = sshll.u32 [#allocation9], 4
          %s325 = int_to_ptr.vmem [resolvable:$true] %s324
          %330 = dma.hbm_to_vmem [thread:$0]  %s4, 128, %s325, [#allocation10], 64, 64, 4
        $region20: #{tpu_custom_call.1} parent=11 // pred_fallthru
          _
        // Predicated region
        $region21: #{tpu_custom_call.1} parent=11 // pred_check
          %p331 = pneg %p178
        $region22: #{tpu_custom_call.1} parent=11 // pred_check_branch
          %333 = sbr.rel (%p331) target = $region24
        $region23: #{tpu_custom_call.1} parent=11 // pred_region
          _
        $region24: #{tpu_custom_call.1} parent=11 // pred_fallthru
          _
        // Predicated region
        $region25: #{tpu_custom_call.1} parent=11 // pred_check
          %p334 = pneg %p199
        $region26: #{tpu_custom_call.1} parent=11 // pred_check_branch
          %336 = sbr.rel (%p334) target = $region28
        $region27: #{tpu_custom_call.1} parent=11 // pred_region
          %s338 = ssub.s32 128, 128
          %339 = vsyncadd [#allocation10], %s338
          %s340 = sshll.u32 [#allocation11], 4
          %s341 = int_to_ptr.vmem [resolvable:$true] %s340
          %346 = dma.hbm_to_vmem [thread:$0]  %s6, 128, %s341, [#allocation10], 64, 64, 4
        $region28: #{tpu_custom_call.1} parent=11 // pred_fallthru
          _
        // Predicated region
        $region29: #{tpu_custom_call.1} parent=11 // pred_check
          %p347 = pneg %p220
        $region30: #{tpu_custom_call.1} parent=11 // pred_check_branch
          %349 = sbr.rel (%p347) target = $region32
        $region31: #{tpu_custom_call.1} parent=11 // pred_region
          _
        $region32: #{tpu_custom_call.1} parent=11 // pred_fallthru
          _
        // Predicated region
        $region33: #{tpu_custom_call.1} parent=11 // pred_check
          %p350 = pneg %p241
        $region34: #{tpu_custom_call.1} parent=11 // pred_check_branch
          %352 = sbr.rel (%p350) target = $region36
        $region35: #{tpu_custom_call.1} parent=11 // pred_region
          _
        $region36: #{tpu_custom_call.1} parent=11 // pred_fallthru
          _
        // Predicated region
        $region37: #{tpu_custom_call.1} parent=11 // pred_check
          %p353 = pneg %p262
        $region38: #{tpu_custom_call.1} parent=11 // pred_check_branch
          %355 = sbr.rel (%p353) target = $region40
        $region39: #{tpu_custom_call.1} parent=11 // pred_region
          _
        $region40: #{tpu_custom_call.1} parent=11 // pred_fallthru
          _
      $region12: #{tpu_custom_call.1} parent=5 // pred_fallthru
        _
      %p356 = scmp.lt.s32.totalorder %s21, 2
      // Predicated region
      $region41: #{tpu_custom_call.1} parent=5 // pred_check
        %p357 = pneg %p356
      $region42: #{tpu_custom_call.1} parent=5 // pred_check_branch
        %359 = sbr.rel (%p357) target = $region44
      $region43: #{tpu_custom_call.1} parent=5 // pred_region
        // Predicated region
        $region45: #{tpu_custom_call.1} parent=43 // pred_check
          %p360 = pneg %p55
        $region46: #{tpu_custom_call.1} parent=43 // pred_check_branch
          %362 = sbr.rel (%p360) target = $region48
        $region47: #{tpu_custom_call.1} parent=43 // pred_region
          %p363 = scmp.lt.s32.totalorder %s28, 1
          %s364 = scalar_select %p363, %s28, 1
          %p365 = scmp.lt.s32.totalorder %s29, 0
          %s366 = scalar_select %p365, %s29, 0
          %s367 = sadd.s32 %s366, %s364
          %s368 = smul.addr %s367, 4
          %s369 = scalar_lea.vmem %s0, %s368
        $region48: #{tpu_custom_call.1} parent=43 // pred_fallthru
          _
        // Predicated region
        $region49: #{tpu_custom_call.1} parent=43 // pred_check
          %p370 = pneg %p81
        $region50: #{tpu_custom_call.1} parent=43 // pred_check_branch
          %372 = sbr.rel (%p370) target = $region52
        $region51: #{tpu_custom_call.1} parent=43 // pred_region
          %p373 = scmp.lt.s32.totalorder %s28, 1
          %s374 = scalar_select %p373, %s28, 1
          %s375 = smul.addr %s374, 4
          %s376 = scalar_lea.vmem %s1, %s375
        $region52: #{tpu_custom_call.1} parent=43 // pred_fallthru
          _
        // Predicated region
        $region53: #{tpu_custom_call.1} parent=43 // pred_check
          %p377 = pneg %p109
        $region54: #{tpu_custom_call.1} parent=43 // pred_check_branch
          %379 = sbr.rel (%p377) target = $region56
        $region55: #{tpu_custom_call.1} parent=43 // pred_region
          %p380 = scmp.lt.s32.totalorder %s28, 1
          %s381 = scalar_select %p380, %s28, 1
          %p382 = scmp.lt.s32.totalorder %s29, 0
          %s383 = scalar_select %p382, %s29, 0
          %s384 = sadd.s32 %s383, %s381
          %s385 = smul.addr %s384, 4
          %s386 = scalar_lea.vmem %s2, %s385
        $region56: #{tpu_custom_call.1} parent=43 // pred_fallthru
          _
      $region44: #{tpu_custom_call.1} parent=5 // pred_fallthru
        _
      %p387 = scmp.le.s32.totalorder 1, %s21
      %p388 = scmp.lt.s32.totalorder %s21, 3
      %p389 = pnand %p387, %p388
      %p390 = pneg %p389
      // Predicated region
      $region57: #{tpu_custom_call.1} parent=5 // pred_check
        _
      $region58: #{tpu_custom_call.1} parent=5 // pred_check_branch
        %392 = sbr.rel (%p389) target = $region60
      $region59: #{tpu_custom_call.1} parent=5 // pred_region
        %s393 = ssub.s32 %s21, 1
        // Predicated region
        $region61: #{tpu_custom_call.1} parent=59 // pred_check
          %p394 = pneg %p136
        $region62: #{tpu_custom_call.1} parent=59 // pred_check_branch
          %396 = sbr.rel (%p394) target = $region64
        $region63: #{tpu_custom_call.1} parent=59 // pred_region
          %397 = dma.done [#allocation7], 128
        $region64: #{tpu_custom_call.1} parent=59 // pred_fallthru
          _
        // Predicated region
        $region65: #{tpu_custom_call.1} parent=59 // pred_check
          %p398 = pneg %p157
        $region66: #{tpu_custom_call.1} parent=59 // pred_check_branch
          %400 = sbr.rel (%p398) target = $region68
        $region67: #{tpu_custom_call.1} parent=59 // pred_region
          %401 = dma.done [#allocation10], 128
        $region68: #{tpu_custom_call.1} parent=59 // pred_fallthru
          _
        // Predicated region
        $region69: #{tpu_custom_call.1} parent=59 // pred_check
          %p402 = pneg %p199
        $region70: #{tpu_custom_call.1} parent=59 // pred_check_branch
          %404 = sbr.rel (%p402) target = $region72
        $region71: #{tpu_custom_call.1} parent=59 // pred_region
          %405 = dma.done [#allocation10], 128
        $region72: #{tpu_custom_call.1} parent=59 // pred_fallthru
          _
        %p406 = scmp.lt.s32.totalorder %s30, 1
        %s407 = scalar_select %p406, %s30, 1
        %p408 = scmp.lt.s32.totalorder %s31, 0
        %s409 = scalar_select %p408, %s31, 0
        %s410 = sadd.s32 %s409, %s407
        %s411 = smul.addr %s410, 4
        %s412 = scalar_lea.vmem %s0, %s411
        %p413 = pneg %p61
        %p414 = pneg %p58
        %p415 = scmp.lt.s32.totalorder %s30, 1
        %s416 = scalar_select %p415, %s30, 1
        %s417 = smul.addr %s416, 4
        %s418 = scalar_lea.vmem %s1, %s417
        %p419 = pneg %p87
        %p420 = pneg %p84
        %p421 = scmp.lt.s32.totalorder %s30, 1
        %s422 = scalar_select %p421, %s30, 1
        %p423 = scmp.lt.s32.totalorder %s31, 0
        %s424 = scalar_select %p423, %s31, 0
        %s425 = sadd.s32 %s424, %s422
        %s426 = smul.addr %s425, 4
        %s427 = scalar_lea.vmem %s2, %s426
        %p428 = pneg %p115
        %p429 = pneg %p112
        %p430 = pneg %p136
        %p431 = pneg %p133
        %p432 = pneg %p157
        %p433 = pneg %p154
        %p434 = pneg %p178
        %p435 = pneg %p175
        %p436 = pneg %p199
        %p437 = pneg %p196
        %p438 = pneg %p220
        %p439 = pneg %p217
        %p440 = pneg %p241
        %p441 = pneg %p238
        %p442 = pneg %p262
        %p443 = pneg %p259
        %p444 = pneg %p290
        %p445 = pneg %p287
        %s446 = sand.u32 %s277, 1
        %s447 = scalar_lea.sflag [#allocation8], %s446
        %s448 = sand.u32 %s277, 1
        %s449 = smul.addr %s448, 8
        %s450 = scalar_lea.vmem [#allocation12], %s449
        %p451 = scmp.lt.s32.totalorder %s30, 1
        %s452 = scalar_select %p451, %s30, 1
        %p453 = scmp.lt.s32.totalorder %s31, 0
        %s454 = scalar_select %p453, %s31, 0
        %s455 = sadd.s32 %s454, %s452
        %s456 = smul.addr %s455, 4
        %s457 = scalar_lea.vmem %s0, %s456
        %p458 = scmp.lt.s32.totalorder %s30, 1
        %s459 = scalar_select %p458, %s30, 1
        %s460 = smul.addr %s459, 4
        %s461 = scalar_lea.vmem %s1, %s460
        %p462 = scmp.lt.s32.totalorder %s30, 1
        %s463 = scalar_select %p462, %s30, 1
        %p464 = scmp.lt.s32.totalorder %s31, 0
        %s465 = scalar_select %p464, %s31, 0
        %s466 = sadd.s32 %s465, %s463
        %s467 = smul.addr %s466, 4
        %s468 = scalar_lea.vmem %s2, %s467
        %p470 = scmp.eq.s32.totalorder %s31, 0
        // Predicated region
        $region73: #{tpu_custom_call.1} parent=59 // pred_check
          %p471 = pneg %p470
        $region74: #{tpu_custom_call.1} parent=59 // pred_check_branch
          %473 = sbr.rel (%p471) target = $region76
        $region75: #{tpu_custom_call.1} parent=59 // pred_region
          %v474 = vld [vmem:[%s461] sm:$0xf]
          %v475 = vld [vmem:[#allocation9] sm:$0xf]
          %v476 = vld [vmem:[#allocation9 + $0x4] sm:$0xf]
          %v479 = vunpack.c.l.b16 %v475
          %v480 = vunpack.c.l.b16 %v476
          %v481 = vpack.c.b16 %v480, %v479
          %vm483 = vcmask 130048
          %v485 = vsel %vm483, %v474, 0
          %487 = vmatprep.subr.bf16.mxu0 0
          %488 = vmatpush1.bf16.msra.mxu0 %v481
          %489 = vmatprep.subr.bf16.mxu0 0
          %490 = vmatpush1.bf16.msra.mxu0 0
          %491 = vmatprep.subr.bf16.mxu0 0
          %492 = vmatpush1.bf16.msra.mxu0 0
          %493 = vmatprep.subr.bf16.mxu0 0
          %494 = vmatpush1.bf16.msra.mxu0 0
          %495 = vmatprep.subr.bf16.mxu0 0
          %496 = vmatpush1.bf16.msra.mxu0 0
          %497 = vmatprep.subr.bf16.mxu0 0
          %498 = vmatpush1.bf16.msra.mxu0 0
          %499 = vmatprep.subr.bf16.mxu0 0
          %500 = vmatpush1.bf16.msra.mxu0 0
          %501 = vmatprep.subr.bf16.mxu0 0
          %502 = vmatpush1.bf16.msra.mxu0 0
          %503 = vmatprep.subr.bf16.mxu0 0
          %504 = vmatpush1.bf16.msra.mxu0 0
          %505 = vmatprep.subr.bf16.mxu0 0
          %506 = vmatpush1.bf16.msra.mxu0 0
          %507 = vmatprep.subr.bf16.mxu0 0
          %508 = vmatpush1.bf16.msra.mxu0 0
          %509 = vmatprep.subr.bf16.mxu0 0
          %510 = vmatpush1.bf16.msra.mxu0 0
          %511 = vmatprep.subr.bf16.mxu0 0
          %512 = vmatpush1.bf16.msra.mxu0 0
          %513 = vmatprep.subr.bf16.mxu0 0
          %514 = vmatpush1.bf16.msra.mxu0 0
          %515 = vmatprep.subr.bf16.mxu0 0
          %516 = vmatpush1.bf16.msra.mxu0 0
          %517 = vmatprep.subr.bf16.mxu0 0
          %518 = vmatpush1.bf16.msra.mxu0 0
          %519 = vmatprep.mubr.bf16.mxu0 0
          %520 = vmatmul.mubr.bf16.gmra.mrb[0].mxu0 %v485
          %v521 = vpop.f32.mrb[0].mxu0
          %v522 = vadd.f32 0.0, %v521
          %v523 = vpop.f32.mrb[0].mxu0
          %v524 = vpop.f32.mrb[0].mxu0
          %v525 = vpop.f32.mrb[0].mxu0
          %526 = vdwg.mxu0
          %v527 = vld [vmem:[%s5] sm:$0xf]
          %v528 = vld [vmem:[%s5 + $0x4] sm:$0xf]
          %v531 = vunpack.c.l.b16 %v527
          %v532 = vunpack.c.l.b16 %v528
          %v533 = vpack.c.b16 %v532, %v531
          %535 = vmatprep.subr.bf16.mxu0 0
          %536 = vmatpush1.bf16.msra.mxu0 %v533
          %537 = vmatprep.subr.bf16.mxu0 0
          %538 = vmatpush1.bf16.msra.mxu0 0
          %539 = vmatprep.subr.bf16.mxu0 0
          %540 = vmatpush1.bf16.msra.mxu0 0
          %541 = vmatprep.subr.bf16.mxu0 0
          %542 = vmatpush1.bf16.msra.mxu0 0
          %543 = vmatprep.subr.bf16.mxu0 0
          %544 = vmatpush1.bf16.msra.mxu0 0
          %545 = vmatprep.subr.bf16.mxu0 0
          %546 = vmatpush1.bf16.msra.mxu0 0
          %547 = vmatprep.subr.bf16.mxu0 0
          %548 = vmatpush1.bf16.msra.mxu0 0
          %549 = vmatprep.subr.bf16.mxu0 0
          %550 = vmatpush1.bf16.msra.mxu0 0
          %551 = vmatprep.subr.bf16.mxu0 0
          %552 = vmatpush1.bf16.msra.mxu0 0
          %553 = vmatprep.subr.bf16.mxu0 0
          %554 = vmatpush1.bf16.msra.mxu0 0
          %555 = vmatprep.subr.bf16.mxu0 0
          %556 = vmatpush1.bf16.msra.mxu0 0
          %557 = vmatprep.subr.bf16.mxu0 0
          %558 = vmatpush1.bf16.msra.mxu0 0
          %559 = vmatprep.subr.bf16.mxu0 0
          %560 = vmatpush1.bf16.msra.mxu0 0
          %561 = vmatprep.subr.bf16.mxu0 0
          %562 = vmatpush1.bf16.msra.mxu0 0
          %563 = vmatprep.subr.bf16.mxu0 0
          %564 = vmatpush1.bf16.msra.mxu0 0
          %565 = vmatprep.subr.bf16.mxu0 0
          %566 = vmatpush1.bf16.msra.mxu0 0
          %567 = vmatprep.mubr.bf16.mxu0 0
          %568 = vmatmul.mubr.bf16.gmra.mrb[0].mxu0 %v485
          %v569 = vpop.f32.mrb[0].mxu0
          %v570 = vadd.f32 0.0, %v569
          %v571 = vpop.f32.mrb[0].mxu0
          %v572 = vpop.f32.mrb[0].mxu0
          %v573 = vpop.f32.mrb[0].mxu0
          %574 = vdwg.mxu0
          %v575 = vpack.c.bf16 %v522, %v522
          %v576 = vpack.c.bf16 %v570, %v570
          %vm577 = vcmask 60416
          %578 = vst.msk [vmem:[#allocation2] sm:$0xf] %vm577, %v575
          %579 = vst.msk [vmem:[#allocation3] sm:$0xf] %vm577, %v576
          %v581 = vunpack.c.l.b16 %v575
          %v582 = vpack.c.b16 %v581, %v581
          %583 = vrot.lane.b32.xlu0 %v582, 120
          %v584 = vpop.permute.xlu0 %583
          %s586 = scalar_lea.vmem [#allocation2], 4
          %587 = vst.msk [vmem:[%s586] sm:$0xf] %vm577, %v584
          %v589 = vunpack.c.l.b16 %v576
          %v590 = vpack.c.b16 %v589, %v589
          %591 = vrot.lane.b32.xlu0 %v590, 120
          %v592 = vpop.permute.xlu0 %591
          %s594 = scalar_lea.vmem [#allocation3], 4
          %595 = vst.msk [vmem:[%s594] sm:$0xf] %vm577, %v592
          %596 = vrot.lane.b32.xlu0 %v582, 112
          %v597 = vpop.permute.xlu0 %596
          %s599 = scalar_lea.vmem [#allocation2], 8
          %600 = vst.msk [vmem:[%s599] sm:$0xf] %vm577, %v597
          %601 = vrot.lane.b32.xlu0 %v590, 112
          %v602 = vpop.permute.xlu0 %601
          %s604 = scalar_lea.vmem [#allocation3], 8
          %605 = vst.msk [vmem:[%s604] sm:$0xf] %vm577, %v602
          %606 = vrot.lane.b32.xlu0 %v582, 104
          %v607 = vpop.permute.xlu0 %606
          %s609 = scalar_lea.vmem [#allocation2], 12
          %610 = vst.msk [vmem:[%s609] sm:$0xf] %vm577, %v607
          %611 = vrot.lane.b32.xlu0 %v590, 104
          %v612 = vpop.permute.xlu0 %611
          %s614 = scalar_lea.vmem [#allocation3], 12
          %615 = vst.msk [vmem:[%s614] sm:$0xf] %vm577, %v612
        $region76: #{tpu_custom_call.1} parent=59 // pred_fallthru
          _
        %v616 = vld [vmem:[%s457] sm:$0xf]
        %v617 = vld [vmem:[#allocation6] sm:$0xf]
        %v618 = vld [vmem:[#allocation6 + $0x4] sm:$0xf]
        %v621 = vunpack.c.l.b16 %v617
        %v622 = vunpack.c.l.b16 %v618
        %v623 = vpack.c.b16 %v622, %v621
        %vm625 = vcmask 130048
        %v627 = vsel %vm625, %v616, 0
        %629 = vmatprep.subr.bf16.mxu0 0
        %630 = vmatpush1.bf16.msra.mxu0 %v623
        %631 = vmatprep.subr.bf16.mxu0 0
        %632 = vmatpush1.bf16.msra.mxu0 0
        %633 = vmatprep.subr.bf16.mxu0 0
        %634 = vmatpush1.bf16.msra.mxu0 0
        %635 = vmatprep.subr.bf16.mxu0 0
        %636 = vmatpush1.bf16.msra.mxu0 0
        %637 = vmatprep.subr.bf16.mxu0 0
        %638 = vmatpush1.bf16.msra.mxu0 0
        %639 = vmatprep.subr.bf16.mxu0 0
        %640 = vmatpush1.bf16.msra.mxu0 0
        %641 = vmatprep.subr.bf16.mxu0 0
        %642 = vmatpush1.bf16.msra.mxu0 0
        %643 = vmatprep.subr.bf16.mxu0 0
        %644 = vmatpush1.bf16.msra.mxu0 0
        %645 = vmatprep.subr.bf16.mxu0 0
        %646 = vmatpush1.bf16.msra.mxu0 0
        %647 = vmatprep.subr.bf16.mxu0 0
        %648 = vmatpush1.bf16.msra.mxu0 0
        %649 = vmatprep.subr.bf16.mxu0 0
        %650 = vmatpush1.bf16.msra.mxu0 0
        %651 = vmatprep.subr.bf16.mxu0 0
        %652 = vmatpush1.bf16.msra.mxu0 0
        %653 = vmatprep.subr.bf16.mxu0 0
        %654 = vmatpush1.bf16.msra.mxu0 0
        %655 = vmatprep.subr.bf16.mxu0 0
        %656 = vmatpush1.bf16.msra.mxu0 0
        %657 = vmatprep.subr.bf16.mxu0 0
        %658 = vmatpush1.bf16.msra.mxu0 0
        %659 = vmatprep.subr.bf16.mxu0 0
        %660 = vmatpush1.bf16.msra.mxu0 0
        %661 = vmatprep.mubr.bf16.mxu0 0
        %662 = vmatmul.mubr.bf16.gmra.mrb[0].mxu0 %v627
        %v663 = vpop.f32.mrb[0].mxu0
        %v664 = vadd.f32 0.0, %v663
        %v665 = vpop.f32.mrb[0].mxu0
        %v666 = vpop.f32.mrb[0].mxu0
        %v667 = vpop.f32.mrb[0].mxu0
        %668 = vdwg.mxu0
        %v669 = vld [vmem:[#allocation11] sm:$0xf]
        %v670 = vld [vmem:[#allocation11 + $0x4] sm:$0xf]
        %v671 = vld [vmem:[%s7] sm:$0x1]
        %v673 = vlaneseq
        %v674 = vshrl.u32 %v673, 7
        %v675 = vsub.s32 0, %v674
        %v676 = vrot.slane %v671, %v675
        %v680 = vunpack.c.l.b16 %v669
        %v681 = vunpack.c.l.b16 %v670
        %v682 = vpack.c.b16 %v681, %v680
        %684 = vmatprep.subr.bf16.mxu0 0
        %685 = vmatpush1.bf16.msra.mxu0 %v682
        %686 = vmatprep.subr.bf16.mxu0 0
        %687 = vmatpush1.bf16.msra.mxu0 0
        %688 = vmatprep.subr.bf16.mxu0 0
        %689 = vmatpush1.bf16.msra.mxu0 0
        %690 = vmatprep.subr.bf16.mxu0 0
        %691 = vmatpush1.bf16.msra.mxu0 0
        %692 = vmatprep.subr.bf16.mxu0 0
        %693 = vmatpush1.bf16.msra.mxu0 0
        %694 = vmatprep.subr.bf16.mxu0 0
        %695 = vmatpush1.bf16.msra.mxu0 0
        %696 = vmatprep.subr.bf16.mxu0 0
        %697 = vmatpush1.bf16.msra.mxu0 0
        %698 = vmatprep.subr.bf16.mxu0 0
        %699 = vmatpush1.bf16.msra.mxu0 0
        %700 = vmatprep.subr.bf16.mxu0 0
        %701 = vmatpush1.bf16.msra.mxu0 0
        %702 = vmatprep.subr.bf16.mxu0 0
        %703 = vmatpush1.bf16.msra.mxu0 0
        %704 = vmatprep.subr.bf16.mxu0 0
        %705 = vmatpush1.bf16.msra.mxu0 0
        %706 = vmatprep.subr.bf16.mxu0 0
        %707 = vmatpush1.bf16.msra.mxu0 0
        %708 = vmatprep.subr.bf16.mxu0 0
        %709 = vmatpush1.bf16.msra.mxu0 0
        %710 = vmatprep.subr.bf16.mxu0 0
        %711 = vmatpush1.bf16.msra.mxu0 0
        %712 = vmatprep.subr.bf16.mxu0 0
        %713 = vmatpush1.bf16.msra.mxu0 0
        %714 = vmatprep.subr.bf16.mxu0 0
        %715 = vmatpush1.bf16.msra.mxu0 0
        %716 = vmatprep.mubr.bf16.mxu0 0
        %717 = vmatmul.mubr.bf16.gmra.mrb[0].mxu0 %v627
        %v718 = vpop.f32.mrb[0].mxu0
        %v719 = vadd.f32 %v676, %v718
        %v720 = vpop.f32.mrb[0].mxu0
        %v721 = vpop.f32.mrb[0].mxu0
        %v722 = vpop.f32.mrb[0].mxu0
        %723 = vdwg.mxu0
        %v724 = vxor.u32 %v719, 2147483648
        %v725 = vmul.f32 %v724, 1.442695
        %v726 = vpow.pop %v725
        %v727 = vadd.f32 %v726, 1.0
        %v728 = vrcp.pop %v727
        %v729 = vmul.f32 1.0, %v728
        %v730 = vpack.c.bf16 %v664, %v664
        %vm731 = vcmask 60416
        %732 = vst.msk [vmem:[#allocation4] sm:$0xf] %vm731, %v730
        %v734 = vunpack.c.l.b16 %v730
        %v735 = vpack.c.b16 %v734, %v734
        %736 = vrot.lane.b32.xlu0 %v735, 120
        %v737 = vpop.permute.xlu0 %736
        %s739 = scalar_lea.vmem [#allocation4], 4
        %740 = vst.msk [vmem:[%s739] sm:$0xf] %vm731, %v737
        %741 = vrot.lane.b32.xlu0 %v735, 112
        %v742 = vpop.permute.xlu0 %741
        %s744 = scalar_lea.vmem [#allocation4], 8
        %745 = vst.msk [vmem:[%s744] sm:$0xf] %vm731, %v742
        %746 = vrot.lane.b32.xlu0 %v735, 104
        %v747 = vpop.permute.xlu0 %746
        %s749 = scalar_lea.vmem [#allocation4], 12
        %750 = vst.msk [vmem:[%s749] sm:$0xf] %vm731, %v747
        %v751 = vld [vmem:[#allocation4] sm:$0xf]
        %v752 = vld [vmem:[#allocation4 + $0x4] sm:$0xf]
        %v753 = vld [vmem:[#allocation4 + $0x8] sm:$0xf]
        %v754 = vld [vmem:[#allocation4 + $0xc] sm:$0xf]
        %v755 = vld [vmem:[#allocation2] sm:$0xf]
        %v756 = vld [vmem:[#allocation2 + $0x4] sm:$0xf]
        %v757 = vld [vmem:[#allocation2 + $0x8] sm:$0xf]
        %v758 = vld [vmem:[#allocation2 + $0xc] sm:$0xf]
        %v759 = vld [vmem:[%s468] sm:$0xf]
        %v760 = vunpack.c.l.bf16 %v759
        %vm761 = vcmask 64512
        %v763 = vsel %vm761, %v751, 0
        %v766 = vsel %vm761, %v755, 0
        %768 = vmatprep.subr.bf16.mxu0 0
        %769 = vmatpush1.bf16.xpose.msra.mxu0 %v766
        %770 = vmatprep.subr.bf16.mxu0 0
        %771 = vmatpush1.bf16.xpose.msra.mxu0 0
        %772 = vmatprep.subr.bf16.mxu0 0
        %773 = vmatpush1.bf16.xpose.msra.mxu0 0
        %774 = vmatprep.subr.bf16.mxu0 0
        %775 = vmatpush1.bf16.xpose.msra.mxu0 0
        %776 = vmatprep.subr.bf16.mxu0 0
        %777 = vmatpush1.bf16.xpose.msra.mxu0 0
        %778 = vmatprep.subr.bf16.mxu0 0
        %779 = vmatpush1.bf16.xpose.msra.mxu0 0
        %780 = vmatprep.subr.bf16.mxu0 0
        %781 = vmatpush1.bf16.xpose.msra.mxu0 0
        %782 = vmatprep.subr.bf16.mxu0 0
        %783 = vmatpush1.bf16.xpose.msra.mxu0 0
        %784 = vmatprep.subr.bf16.mxu0 0
        %785 = vmatpush1.bf16.xpose.msra.mxu0 0
        %786 = vmatprep.subr.bf16.mxu0 0
        %787 = vmatpush1.bf16.xpose.msra.mxu0 0
        %788 = vmatprep.subr.bf16.mxu0 0
        %789 = vmatpush1.bf16.xpose.msra.mxu0 0
        %790 = vmatprep.subr.bf16.mxu0 0
        %791 = vmatpush1.bf16.xpose.msra.mxu0 0
        %792 = vmatprep.subr.bf16.mxu0 0
        %793 = vmatpush1.bf16.xpose.msra.mxu0 0
        %794 = vmatprep.subr.bf16.mxu0 0
        %795 = vmatpush1.bf16.xpose.msra.mxu0 0
        %796 = vmatprep.subr.bf16.mxu0 0
        %797 = vmatpush1.bf16.xpose.msra.mxu0 0
        %798 = vmatprep.subr.bf16.mxu0 0
        %799 = vmatpush1.bf16.xpose.msra.mxu0 0
        %800 = vmatprep.mubr.bf16.mxu0 0
        %801 = vmatmul.mubr.bf16.gmra.mrb[0].mxu0 %v763
        %v802 = vpop.f32.mrb[0].mxu0
        %v803 = vadd.f32 %v760, %v802
        %v804 = vpop.f32.mrb[0].mxu0
        %v805 = vpop.f32.mrb[0].mxu0
        %v806 = vpop.f32.mrb[0].mxu0
        %807 = vdwg.mxu0
        %v809 = vsel %vm761, %v752, 0
        %v812 = vsel %vm761, %v756, 0
        %814 = vmatprep.subr.bf16.mxu0 0
        %815 = vmatpush1.bf16.xpose.msra.mxu0 %v812
        %816 = vmatprep.subr.bf16.mxu0 0
        %817 = vmatpush1.bf16.xpose.msra.mxu0 0
        %818 = vmatprep.subr.bf16.mxu0 0
        %819 = vmatpush1.bf16.xpose.msra.mxu0 0
        %820 = vmatprep.subr.bf16.mxu0 0
        %821 = vmatpush1.bf16.xpose.msra.mxu0 0
        %822 = vmatprep.subr.bf16.mxu0 0
        %823 = vmatpush1.bf16.xpose.msra.mxu0 0
        %824 = vmatprep.subr.bf16.mxu0 0
        %825 = vmatpush1.bf16.xpose.msra.mxu0 0
        %826 = vmatprep.subr.bf16.mxu0 0
        %827 = vmatpush1.bf16.xpose.msra.mxu0 0
        %828 = vmatprep.subr.bf16.mxu0 0
        %829 = vmatpush1.bf16.xpose.msra.mxu0 0
        %830 = vmatprep.subr.bf16.mxu0 0
        %831 = vmatpush1.bf16.xpose.msra.mxu0 0
        %832 = vmatprep.subr.bf16.mxu0 0
        %833 = vmatpush1.bf16.xpose.msra.mxu0 0
        %834 = vmatprep.subr.bf16.mxu0 0
        %835 = vmatpush1.bf16.xpose.msra.mxu0 0
        %836 = vmatprep.subr.bf16.mxu0 0
        %837 = vmatpush1.bf16.xpose.msra.mxu0 0
        %838 = vmatprep.subr.bf16.mxu0 0
        %839 = vmatpush1.bf16.xpose.msra.mxu0 0
        %840 = vmatprep.subr.bf16.mxu0 0
        %841 = vmatpush1.bf16.xpose.msra.mxu0 0
        %842 = vmatprep.subr.bf16.mxu0 0
        %843 = vmatpush1.bf16.xpose.msra.mxu0 0
        %844 = vmatprep.subr.bf16.mxu0 0
        %845 = vmatpush1.bf16.xpose.msra.mxu0 0
        %846 = vmatprep.mubr.bf16.mxu0 0
        %847 = vmatmul.mubr.bf16.gmra.mrb[0].mxu0 %v809
        %v848 = vpop.f32.mrb[0].mxu0
        %v849 = vadd.f32 %v760, %v848
        %v850 = vpop.f32.mrb[0].mxu0
        %v851 = vpop.f32.mrb[0].mxu0
        %v852 = vpop.f32.mrb[0].mxu0
        %853 = vdwg.mxu0
        %v855 = vsel %vm761, %v753, 0
        %v858 = vsel %vm761, %v757, 0
        %860 = vmatprep.subr.bf16.mxu0 0
        %861 = vmatpush1.bf16.xpose.msra.mxu0 %v858
        %862 = vmatprep.subr.bf16.mxu0 0
        %863 = vmatpush1.bf16.xpose.msra.mxu0 0
        %864 = vmatprep.subr.bf16.mxu0 0
        %865 = vmatpush1.bf16.xpose.msra.mxu0 0
        %866 = vmatprep.subr.bf16.mxu0 0
        %867 = vmatpush1.bf16.xpose.msra.mxu0 0
        %868 = vmatprep.subr.bf16.mxu0 0
        %869 = vmatpush1.bf16.xpose.msra.mxu0 0
        %870 = vmatprep.subr.bf16.mxu0 0
        %871 = vmatpush1.bf16.xpose.msra.mxu0 0
        %872 = vmatprep.subr.bf16.mxu0 0
        %873 = vmatpush1.bf16.xpose.msra.mxu0 0
        %874 = vmatprep.subr.bf16.mxu0 0
        %875 = vmatpush1.bf16.xpose.msra.mxu0 0
        %876 = vmatprep.subr.bf16.mxu0 0
        %877 = vmatpush1.bf16.xpose.msra.mxu0 0
        %878 = vmatprep.subr.bf16.mxu0 0
        %879 = vmatpush1.bf16.xpose.msra.mxu0 0
        %880 = vmatprep.subr.bf16.mxu0 0
        %881 = vmatpush1.bf16.xpose.msra.mxu0 0
        %882 = vmatprep.subr.bf16.mxu0 0
        %883 = vmatpush1.bf16.xpose.msra.mxu0 0
        %884 = vmatprep.subr.bf16.mxu0 0
        %885 = vmatpush1.bf16.xpose.msra.mxu0 0
        %886 = vmatprep.subr.bf16.mxu0 0
        %887 = vmatpush1.bf16.xpose.msra.mxu0 0
        %888 = vmatprep.subr.bf16.mxu0 0
        %889 = vmatpush1.bf16.xpose.msra.mxu0 0
        %890 = vmatprep.subr.bf16.mxu0 0
        %891 = vmatpush1.bf16.xpose.msra.mxu0 0
        %892 = vmatprep.mubr.bf16.mxu0 0
        %893 = vmatmul.mubr.bf16.gmra.mrb[0].mxu0 %v855
        %v894 = vpop.f32.mrb[0].mxu0
        %v895 = vadd.f32 %v760, %v894
        %v896 = vpop.f32.mrb[0].mxu0
        %v897 = vpop.f32.mrb[0].mxu0
        %v898 = vpop.f32.mrb[0].mxu0
        %899 = vdwg.mxu0
        %v901 = vsel %vm761, %v754, 0
        %v904 = vsel %vm761, %v758, 0
        %906 = vmatprep.subr.bf16.mxu0 0
        %907 = vmatpush1.bf16.xpose.msra.mxu0 %v904
        %908 = vmatprep.subr.bf16.mxu0 0
        %909 = vmatpush1.bf16.xpose.msra.mxu0 0
        %910 = vmatprep.subr.bf16.mxu0 0
        %911 = vmatpush1.bf16.xpose.msra.mxu0 0
        %912 = vmatprep.subr.bf16.mxu0 0
        %913 = vmatpush1.bf16.xpose.msra.mxu0 0
        %914 = vmatprep.subr.bf16.mxu0 0
        %915 = vmatpush1.bf16.xpose.msra.mxu0 0
        %916 = vmatprep.subr.bf16.mxu0 0
        %917 = vmatpush1.bf16.xpose.msra.mxu0 0
        %918 = vmatprep.subr.bf16.mxu0 0
        %919 = vmatpush1.bf16.xpose.msra.mxu0 0
        %920 = vmatprep.subr.bf16.mxu0 0
        %921 = vmatpush1.bf16.xpose.msra.mxu0 0
        %922 = vmatprep.subr.bf16.mxu0 0
        %923 = vmatpush1.bf16.xpose.msra.mxu0 0
        %924 = vmatprep.subr.bf16.mxu0 0
        %925 = vmatpush1.bf16.xpose.msra.mxu0 0
        %926 = vmatprep.subr.bf16.mxu0 0
        %927 = vmatpush1.bf16.xpose.msra.mxu0 0
        %928 = vmatprep.subr.bf16.mxu0 0
        %929 = vmatpush1.bf16.xpose.msra.mxu0 0
        %930 = vmatprep.subr.bf16.mxu0 0
        %931 = vmatpush1.bf16.xpose.msra.mxu0 0
        %932 = vmatprep.subr.bf16.mxu0 0
        %933 = vmatpush1.bf16.xpose.msra.mxu0 0
        %934 = vmatprep.subr.bf16.mxu0 0
        %935 = vmatpush1.bf16.xpose.msra.mxu0 0
        %936 = vmatprep.subr.bf16.mxu0 0
        %937 = vmatpush1.bf16.xpose.msra.mxu0 0
        %938 = vmatprep.mubr.bf16.mxu0 0
        %939 = vmatmul.mubr.bf16.gmra.mrb[0].mxu0 %v901
        %v940 = vpop.f32.mrb[0].mxu0
        %v941 = vadd.f32 %v760, %v940
        %v942 = vpop.f32.mrb[0].mxu0
        %v943 = vpop.f32.mrb[0].mxu0
        %v944 = vpop.f32.mrb[0].mxu0
        %945 = vdwg.mxu0
        %v946 = vsel %vm761, %v803, -inf
        %947 = vmax.xlane.f32.xlu0 %v946
        %v948 = vpop.xlane.xlu0 %947
        %v949 = vsel %vm761, %v849, -inf
        %950 = vmax.xlane.f32.xlu0 %v949
        %v951 = vpop.xlane.xlu0 %950
        %v952 = vsel %vm761, %v895, -inf
        %953 = vmax.xlane.f32.xlu0 %v952
        %v954 = vpop.xlane.xlu0 %953
        %v955 = vsel %vm761, %v941, -inf
        %956 = vmax.xlane.f32.xlu0 %v955
        %v957 = vpop.xlane.xlu0 %956
        %v958 = vsub.f32 %v803, %v948
        %v959 = vsub.f32 %v849, %v951
        %v960 = vsub.f32 %v895, %v954
        %v961 = vsub.f32 %v941, %v957
        %v962 = vmul.f32 %v958, 1.442695
        %v963 = vpow.pop %v962
        %v964 = vmul.f32 %v959, 1.442695
        %v965 = vpow.pop %v964
        %v966 = vmul.f32 %v960, 1.442695
        %v967 = vpow.pop %v966
        %v968 = vmul.f32 %v961, 1.442695
        %v969 = vpow.pop %v968
        %v970 = vsel %vm761, %v963, 0.0
        %971 = vadd.xlane.f32.xlu0 %v970
        %v972 = vpop.xlane.xlu0 %971
        %v973 = vsel %vm761, %v965, 0.0
        %974 = vadd.xlane.f32.xlu0 %v973
        %v975 = vpop.xlane.xlu0 %974
        %v976 = vsel %vm761, %v967, 0.0
        %977 = vadd.xlane.f32.xlu0 %v976
        %v978 = vpop.xlane.xlu0 %977
        %v979 = vsel %vm761, %v969, 0.0
        %980 = vadd.xlane.f32.xlu0 %v979
        %v981 = vpop.xlane.xlu0 %980
        %v982 = vpack.c.bf16 %v963, %v963
        %v983 = vpack.c.bf16 %v965, %v965
        %v984 = vpack.c.bf16 %v967, %v967
        %v985 = vpack.c.bf16 %v969, %v969
        %v986 = vld [vmem:[#allocation3] sm:$0xf]
        %v987 = vld [vmem:[#allocation3 + $0x4] sm:$0xf]
        %v988 = vld [vmem:[#allocation3 + $0x8] sm:$0xf]
        %v989 = vld [vmem:[#allocation3 + $0xc] sm:$0xf]
        %v991 = vsel %vm761, %v982, 0
        %vm993 = vcmask 1043456
        %v995 = vsel %vm993, %v986, 0
        %997 = vmatprep.subr.bf16.mxu0 0
        %998 = vmatpush1.bf16.msra.mxu0 %v995
        %999 = vmatprep.subr.bf16.mxu0 0
        %1000 = vmatpush1.bf16.msra.mxu0 0
        %1001 = vmatprep.subr.bf16.mxu0 0
        %1002 = vmatpush1.bf16.msra.mxu0 0
        %1003 = vmatprep.subr.bf16.mxu0 0
        %1004 = vmatpush1.bf16.msra.mxu0 0
        %1005 = vmatprep.subr.bf16.mxu0 0
        %1006 = vmatpush1.bf16.msra.mxu0 0
        %1007 = vmatprep.subr.bf16.mxu0 0
        %1008 = vmatpush1.bf16.msra.mxu0 0
        %1009 = vmatprep.subr.bf16.mxu0 0
        %1010 = vmatpush1.bf16.msra.mxu0 0
        %1011 = vmatprep.subr.bf16.mxu0 0
        %1012 = vmatpush1.bf16.msra.mxu0 0
        %1013 = vmatprep.subr.bf16.mxu0 0
        %1014 = vmatpush1.bf16.msra.mxu0 0
        %1015 = vmatprep.subr.bf16.mxu0 0
        %1016 = vmatpush1.bf16.msra.mxu0 0
        %1017 = vmatprep.subr.bf16.mxu0 0
        %1018 = vmatpush1.bf16.msra.mxu0 0
        %1019 = vmatprep.subr.bf16.mxu0 0
        %1020 = vmatpush1.bf16.msra.mxu0 0
        %1021 = vmatprep.subr.bf16.mxu0 0
        %1022 = vmatpush1.bf16.msra.mxu0 0
        %1023 = vmatprep.subr.bf16.mxu0 0
        %1024 = vmatpush1.bf16.msra.mxu0 0
        %1025 = vmatprep.subr.bf16.mxu0 0
        %1026 = vmatpush1.bf16.msra.mxu0 0
        %1027 = vmatprep.subr.bf16.mxu0 0
        %1028 = vmatpush1.bf16.msra.mxu0 0
        %1029 = vmatprep.mubr.bf16.mxu0 0
        %1030 = vmatmul.mubr.bf16.gmra.mrb[0].mxu0 %v991
        %v1031 = vpop.f32.mrb[0].mxu0
        %v1032 = vadd.f32 0.0, %v1031
        %v1033 = vpop.f32.mrb[0].mxu0
        %v1034 = vpop.f32.mrb[0].mxu0
        %v1035 = vpop.f32.mrb[0].mxu0
        %1036 = vdwg.mxu0
        %v1038 = vsel %vm761, %v983, 0
        %v1041 = vsel %vm993, %v987, 0
        %1043 = vmatprep.subr.bf16.mxu0 0
        %1044 = vmatpush1.bf16.msra.mxu0 %v1041
        %1045 = vmatprep.subr.bf16.mxu0 0
        %1046 = vmatpush1.bf16.msra.mxu0 0
        %1047 = vmatprep.subr.bf16.mxu0 0
        %1048 = vmatpush1.bf16.msra.mxu0 0
        %1049 = vmatprep.subr.bf16.mxu0 0
        %1050 = vmatpush1.bf16.msra.mxu0 0
        %1051 = vmatprep.subr.bf16.mxu0 0
        %1052 = vmatpush1.bf16.msra.mxu0 0
        %1053 = vmatprep.subr.bf16.mxu0 0
        %1054 = vmatpush1.bf16.msra.mxu0 0
        %1055 = vmatprep.subr.bf16.mxu0 0
        %1056 = vmatpush1.bf16.msra.mxu0 0
        %1057 = vmatprep.subr.bf16.mxu0 0
        %1058 = vmatpush1.bf16.msra.mxu0 0
        %1059 = vmatprep.subr.bf16.mxu0 0
        %1060 = vmatpush1.bf16.msra.mxu0 0
        %1061 = vmatprep.subr.bf16.mxu0 0
        %1062 = vmatpush1.bf16.msra.mxu0 0
        %1063 = vmatprep.subr.bf16.mxu0 0
        %1064 = vmatpush1.bf16.msra.mxu0 0
        %1065 = vmatprep.subr.bf16.mxu0 0
        %1066 = vmatpush1.bf16.msra.mxu0 0
        %1067 = vmatprep.subr.bf16.mxu0 0
        %1068 = vmatpush1.bf16.msra.mxu0 0
        %1069 = vmatprep.subr.bf16.mxu0 0
        %1070 = vmatpush1.bf16.msra.mxu0 0
        %1071 = vmatprep.subr.bf16.mxu0 0
        %1072 = vmatpush1.bf16.msra.mxu0 0
        %1073 = vmatprep.subr.bf16.mxu0 0
        %1074 = vmatpush1.bf16.msra.mxu0 0
        %1075 = vmatprep.mubr.bf16.mxu0 0
        %1076 = vmatmul.mubr.bf16.gmra.mrb[0].mxu0 %v1038
        %v1077 = vpop.f32.mrb[0].mxu0
        %v1078 = vadd.f32 0.0, %v1077
        %v1079 = vpop.f32.mrb[0].mxu0
        %v1080 = vpop.f32.mrb[0].mxu0
        %v1081 = vpop.f32.mrb[0].mxu0
        %1082 = vdwg.mxu0
        %v1084 = vsel %vm761, %v984, 0
        %v1087 = vsel %vm993, %v988, 0
        %1089 = vmatprep.subr.bf16.mxu0 0
        %1090 = vmatpush1.bf16.msra.mxu0 %v1087
        %1091 = vmatprep.subr.bf16.mxu0 0
        %1092 = vmatpush1.bf16.msra.mxu0 0
        %1093 = vmatprep.subr.bf16.mxu0 0
        %1094 = vmatpush1.bf16.msra.mxu0 0
        %1095 = vmatprep.subr.bf16.mxu0 0
        %1096 = vmatpush1.bf16.msra.mxu0 0
        %1097 = vmatprep.subr.bf16.mxu0 0
        %1098 = vmatpush1.bf16.msra.mxu0 0
        %1099 = vmatprep.subr.bf16.mxu0 0
        %1100 = vmatpush1.bf16.msra.mxu0 0
        %1101 = vmatprep.subr.bf16.mxu0 0
        %1102 = vmatpush1.bf16.msra.mxu0 0
        %1103 = vmatprep.subr.bf16.mxu0 0
        %1104 = vmatpush1.bf16.msra.mxu0 0
        %1105 = vmatprep.subr.bf16.mxu0 0
        %1106 = vmatpush1.bf16.msra.mxu0 0
        %1107 = vmatprep.subr.bf16.mxu0 0
        %1108 = vmatpush1.bf16.msra.mxu0 0
        %1109 = vmatprep.subr.bf16.mxu0 0
        %1110 = vmatpush1.bf16.msra.mxu0 0
        %1111 = vmatprep.subr.bf16.mxu0 0
        %1112 = vmatpush1.bf16.msra.mxu0 0
        %1113 = vmatprep.subr.bf16.mxu0 0
        %1114 = vmatpush1.bf16.msra.mxu0 0
        %1115 = vmatprep.subr.bf16.mxu0 0
        %1116 = vmatpush1.bf16.msra.mxu0 0
        %1117 = vmatprep.subr.bf16.mxu0 0
        %1118 = vmatpush1.bf16.msra.mxu0 0
        %1119 = vmatprep.subr.bf16.mxu0 0
        %1120 = vmatpush1.bf16.msra.mxu0 0
        %1121 = vmatprep.mubr.bf16.mxu0 0
        %1122 = vmatmul.mubr.bf16.gmra.mrb[0].mxu0 %v1084
        %v1123 = vpop.f32.mrb[0].mxu0
        %v1124 = vadd.f32 0.0, %v1123
        %v1125 = vpop.f32.mrb[0].mxu0
        %v1126 = vpop.f32.mrb[0].mxu0
        %v1127 = vpop.f32.mrb[0].mxu0
        %1128 = vdwg.mxu0
        %v1130 = vsel %vm761, %v985, 0
        %v1133 = vsel %vm993, %v989, 0
        %1135 = vmatprep.subr.bf16.mxu0 0
        %1136 = vmatpush1.bf16.msra.mxu0 %v1133
        %1137 = vmatprep.subr.bf16.mxu0 0
        %1138 = vmatpush1.bf16.msra.mxu0 0
        %1139 = vmatprep.subr.bf16.mxu0 0
        %1140 = vmatpush1.bf16.msra.mxu0 0
        %1141 = vmatprep.subr.bf16.mxu0 0
        %1142 = vmatpush1.bf16.msra.mxu0 0
        %1143 = vmatprep.subr.bf16.mxu0 0
        %1144 = vmatpush1.bf16.msra.mxu0 0
        %1145 = vmatprep.subr.bf16.mxu0 0
        %1146 = vmatpush1.bf16.msra.mxu0 0
        %1147 = vmatprep.subr.bf16.mxu0 0
        %1148 = vmatpush1.bf16.msra.mxu0 0
        %1149 = vmatprep.subr.bf16.mxu0 0
        %1150 = vmatpush1.bf16.msra.mxu0 0
        %1151 = vmatprep.subr.bf16.mxu0 0
        %1152 = vmatpush1.bf16.msra.mxu0 0
        %1153 = vmatprep.subr.bf16.mxu0 0
        %1154 = vmatpush1.bf16.msra.mxu0 0
        %1155 = vmatprep.subr.bf16.mxu0 0
        %1156 = vmatpush1.bf16.msra.mxu0 0
        %1157 = vmatprep.subr.bf16.mxu0 0
        %1158 = vmatpush1.bf16.msra.mxu0 0
        %1159 = vmatprep.subr.bf16.mxu0 0
        %1160 = vmatpush1.bf16.msra.mxu0 0
        %1161 = vmatprep.subr.bf16.mxu0 0
        %1162 = vmatpush1.bf16.msra.mxu0 0
        %1163 = vmatprep.subr.bf16.mxu0 0
        %1164 = vmatpush1.bf16.msra.mxu0 0
        %1165 = vmatprep.subr.bf16.mxu0 0
        %1166 = vmatpush1.bf16.msra.mxu0 0
        %1167 = vmatprep.mubr.bf16.mxu0 0
        %1168 = vmatmul.mubr.bf16.gmra.mrb[0].mxu0 %v1130
        %v1169 = vpop.f32.mrb[0].mxu0
        %v1170 = vadd.f32 0.0, %v1169
        %v1171 = vpop.f32.mrb[0].mxu0
        %v1172 = vpop.f32.mrb[0].mxu0
        %v1173 = vpop.f32.mrb[0].mxu0
        %1174 = vdwg.mxu0
        %v1175 = vrcp.pop %v972
        %v1176 = vrcp.pop %v975
        %v1177 = vrcp.pop %v978
        %v1178 = vrcp.pop %v981
        %v1179 = vmul.f32 %v1032, %v1175
        %v1180 = vmul.f32 %v1078, %v1176
        %v1181 = vmul.f32 %v1124, %v1177
        %v1182 = vmul.f32 %v1170, %v1178
        %1183 = vst.msk [vmem:[#allocation5] sm:$0xff] %vm761, %v1179
        %1185 = vrot.lane.b32.xlu0 %v1180, 8
        %v1186 = vpop.permute.xlu0 %1185
        %vm1188 = vcmask 130112
        %1189 = vst.msk [vmem:[#allocation5] sm:$0xff] %vm1188, %v1186
        %1191 = vrot.lane.b32.xlu0 %v1181, 16
        %v1192 = vpop.permute.xlu0 %1191
        %vm1194 = vcmask 195712
        %1195 = vst.msk [vmem:[#allocation5] sm:$0xff] %vm1194, %v1192
        %1197 = vrot.lane.b32.xlu0 %v1182, 24
        %v1198 = vpop.permute.xlu0 %1197
        %vm1200 = vcmask 261312
        %1201 = vst.msk [vmem:[#allocation5] sm:$0xff] %vm1200, %v1198
        %v1202 = vld [vmem:[#allocation5] sm:$0xff]
        %v1203 = vmul.f32 %v1202, %v729
        %v1204 = vpack.c.bf16 %v1203, %v1203
        %v1205 = vld [vmem:[%s8] sm:$0xf]
        %v1206 = vld [vmem:[%s8 + $0x4] sm:$0xf]
        %v1207 = vld [vmem:[%s8 + $0x8] sm:$0xf]
        %v1208 = vld [vmem:[%s8 + $0xc] sm:$0xf]
        %v1209 = vld [vmem:[%s9] sm:$0x1]
        %v1211 = vlaneseq
        %v1212 = vshrl.u32 %v1211, 7
        %v1213 = vsub.s32 0, %v1212
        %v1214 = vrot.slane %v1209, %v1213
        %v1220 = vunpack.c.l.b16 %v1205
        %v1221 = vunpack.c.l.b16 %v1206
        %v1222 = vunpack.c.l.b16 %v1207
        %v1223 = vunpack.c.l.b16 %v1208
        %v1224 = vpack.c.b16 %v1221, %v1220
        %v1225 = vpack.c.b16 %v1223, %v1222
        %vm1228 = vcmask 261120
        %v1230 = vsel %vm1228, %v1204, 0
        %1232 = vmatprep.subr.bf16.mxu0 0
        %1233 = vmatpush1.bf16.msra.mxu0 %v1224
        %1234 = vmatprep.subr.bf16.mxu0 0
        %1235 = vmatpush1.bf16.msra.mxu0 %v1225
        %1236 = vmatprep.subr.bf16.mxu0 0
        %1237 = vmatpush1.bf16.msra.mxu0 0
        %1238 = vmatprep.subr.bf16.mxu0 0
        %1239 = vmatpush1.bf16.msra.mxu0 0
        %1240 = vmatprep.subr.bf16.mxu0 0
        %1241 = vmatpush1.bf16.msra.mxu0 0
        %1242 = vmatprep.subr.bf16.mxu0 0
        %1243 = vmatpush1.bf16.msra.mxu0 0
        %1244 = vmatprep.subr.bf16.mxu0 0
        %1245 = vmatpush1.bf16.msra.mxu0 0
        %1246 = vmatprep.subr.bf16.mxu0 0
        %1247 = vmatpush1.bf16.msra.mxu0 0
        %1248 = vmatprep.subr.bf16.mxu0 0
        %1249 = vmatpush1.bf16.msra.mxu0 0
        %1250 = vmatprep.subr.bf16.mxu0 0
        %1251 = vmatpush1.bf16.msra.mxu0 0
        %1252 = vmatprep.subr.bf16.mxu0 0
        %1253 = vmatpush1.bf16.msra.mxu0 0
        %1254 = vmatprep.subr.bf16.mxu0 0
        %1255 = vmatpush1.bf16.msra.mxu0 0
        %1256 = vmatprep.subr.bf16.mxu0 0
        %1257 = vmatpush1.bf16.msra.mxu0 0
        %1258 = vmatprep.subr.bf16.mxu0 0
        %1259 = vmatpush1.bf16.msra.mxu0 0
        %1260 = vmatprep.subr.bf16.mxu0 0
        %1261 = vmatpush1.bf16.msra.mxu0 0
        %1262 = vmatprep.subr.bf16.mxu0 0
        %1263 = vmatpush1.bf16.msra.mxu0 0
        %1264 = vmatprep.mubr.bf16.mxu0 0
        %1265 = vmatmul.mubr.bf16.gmra.mrb[0].mxu0 %v1230
        %v1266 = vpop.f32.mrb[0].mxu0
        %v1267 = vadd.f32 %v1214, %v1266
        %v1268 = vpop.f32.mrb[0].mxu0
        %v1269 = vpop.f32.mrb[0].mxu0
        %v1270 = vpop.f32.mrb[0].mxu0
        %1271 = vdwg.mxu0
        %1272 = vst.msk [vmem:[%s450] sm:$0xff] %vm625, %v1267
        %s1273 = sand.u32 %s277, 1
        %s1274 = scalar_lea.sflag [#allocation8], %s1273
        %s1275 = sand.u32 %s277, 1
        %s1276 = smul.addr %s1275, 8
        %s1277 = scalar_lea.vmem [#allocation12], %s1276
        // Predicated region
        $region77: #{tpu_custom_call.1} parent=59 // pred_check
          %p1278 = pneg %p287
        $region78: #{tpu_custom_call.1} parent=59 // pred_check_branch
          %1280 = sbr.rel (%p1278) target = $region80
        $region79: #{tpu_custom_call.1} parent=59 // pred_region
          %s1282 = ssub.s32 128, 128
          %1283 = vsyncadd %s1274, %s1282
          %s1284 = sadd.s32 %s31, %s30
          %s1285 = smul.addr %s1284, 128
          %s1286 = scalar_lea.hbm %s10, %s1285
          %s1288 = sshll.u32 %s1277, 4
          %s1289 = int_to_ptr.vmem [resolvable:$true] %s1288
          %1291 = dma.vmem_to_hbm [thread:$0]  %s1289, 128, %s1286, %s1274
        $region80: #{tpu_custom_call.1} parent=59 // pred_fallthru
          _
      $region60: #{tpu_custom_call.1} parent=5 // pred_fallthru
        _
      %p1292 = scmp.le.s32.totalorder 2, %s21
      // Predicated region
      $region81: #{tpu_custom_call.1} parent=5 // pred_check
        %p1293 = pneg %p1292
      $region82: #{tpu_custom_call.1} parent=5 // pred_check_branch
        %1295 = sbr.rel (%p1293) target = $region84
      $region83: #{tpu_custom_call.1} parent=5 // pred_region
        %s1296 = ssub.s32 %s21, 2
        // Predicated region
        $region85: #{tpu_custom_call.1} parent=83 // pred_check
          %p1297 = pneg %p293
        $region86: #{tpu_custom_call.1} parent=83 // pred_check_branch
          %1299 = sbr.rel (%p1297) target = $region88
        $region87: #{tpu_custom_call.1} parent=83 // pred_region
          %s1300 = sand.u32 %s278, 1
          %s1301 = scalar_lea.sflag [#allocation8], %s1300
          %s1302 = sand.u32 %s278, 1
          %s1303 = smul.addr %s1302, 8
          %s1304 = scalar_lea.vmem [#allocation12], %s1303
          %1305 = dma.done %s1301, 128
        $region88: #{tpu_custom_call.1} parent=83 // pred_fallthru
          _
      $region84: #{tpu_custom_call.1} parent=5 // pred_fallthru
        _
    $region6: #{tpu_custom_call.1} parent=1 // loop_footer
      %s25 = sadd.s32 1, %s21
    $region7: #{tpu_custom_call.1} parent=1 // loop_footer_branch
      %20 = sbr.rel target = $region3
    $region8: #{tpu_custom_call.1} parent=1 // loop_exit
      _
    %1306 = vsyncpa [#allocation7], 1
    %s1307 = scalar_lea.sflag [#allocation7], 1
    %1308 = vsyncpa %s1307, 1
    %1309 = vsyncpa [#allocation10], 1
    %1310 = vsyncpa [#allocation8], 1
    %s1311 = scalar_lea.sflag [#allocation8], 1
    %1312 = vsyncpa %s1311, 1

</llo_original>
